<compile_context>
chip_gen: v5e
topology: v5e:2x2
jax: 0.10.0
libtpu: 0.0.40
codegen_flags: <defaults>
</compile_context>

<pallas_src>
import functools

import jax
import jax.numpy as jnp
from jax.experimental import pallas as pl
from jax.experimental.pallas import tpu as pltpu


def _vmem_capacity_bytes(default=64 * 1024 * 1024):
    """Best-effort physical VMEM capacity query (v5e/v6e: 128 MiB, v7x: 64 MiB)."""
    try:
        info = pltpu.get_tpu_info()
        return int(getattr(info, "vmem_capacity_bytes", default))
    except Exception:  # pragma: no cover - conservative fallback off-TPU
        return default


def _cross_attn_kernel(q_ref, kv_ref, wq_ref, wkv_ref, wp_ref, bp_ref, o_ref,
                       kvp_sc, *, num_heads, out_dim, compute_dtype):
    # q_ref  : (1, TQ, dim) bf16        kv_ref : (1, NK, dim) bf16
    # wq_ref : (dim, C)  bf16 [scale folded]
    # wkv_ref: (dim, 2C) bf16 [Wk^T | Wv^T]
    # wp_ref : (C, C)    bf16 (Wproj^T, flat)
    # bp_ref : (1, C)    f32
    # o_ref  : (1, TQ, C)
    # kvp_sc : (NK, 2C)  bf16 persistent VMEM scratch (projected K|V for batch b)
    C = out_dim
    H = num_heads
    hd = C // H
    tq = q_ref.shape[1]
    nk = kv_ref.shape[1]

    # --- K/V projection: once per batch. The n (q-tile) axis is the innermost,
    # "arbitrary" grid axis, so n == 0 runs before every other tile of batch b
    # on the same core and the scratch stays valid across q tiles. ---
    @pl.when(pl.program_id(1) == 0)
    def _():
        kvp_sc[...] = jnp.dot(
            kv_ref[0], wkv_ref[...],
            preferred_element_type=jnp.float32).astype(kvp_sc.dtype)

    # --- Q projection for this tile (attention scale already folded into Wq;
    # qkv_bias=False in the module default). bf16 operands, f32 MXU acc. ---
    qp = jnp.dot(q_ref[0], wq_ref[...],
                 preferred_element_type=jnp.float32).astype(compute_dtype)  # (TQ, C)

    kvp = kvp_sc[...]                                                       # (NK, 2C)

    # --- Head split: reshape + layout-aware transpose (XLU slot, has slack)
    # instead of H masked lane-slice copies + concatenate. ---
    qh = pltpu.einshape('qhd->hqd', qp.reshape(tq, H, hd))                  # (H, TQ, hd)
    kh = pltpu.einshape('khd->hkd', kvp[:, :C].reshape(nk, H, hd))          # (H, NK, hd)
    vh = pltpu.einshape('khd->hkd', kvp[:, C:].reshape(nk, H, hd))          # (H, NK, hd)

    # --- Scores (H, TQ, NK): leading-batch MXU einsum, f32 accumulation; the
    # contraction over the trailing head dim avoids an explicit K transpose. ---
    s = jnp.einsum('hqd,hkd->hqk', qh, kh, preferred_element_type=jnp.float32)

    # --- Max-stabilised softmax numerator in f32. Normalisation is DEFERRED to
    # the PV result (NK/hd fewer multiplies); denominator reciprocal on the EUP.
    # Padded trailing q rows (when N % tq != 0) may compute NaN here; that is
    # row-local and those rows are masked on write, so it is intentional. ---
    s = s - jnp.max(s, axis=-1, keepdims=True)
    p = jnp.exp(s)
    inv_l = pl.reciprocal(jnp.sum(p, axis=-1, keepdims=True), approx=True)  # (H, TQ, 1)
    # attn_drop / proj_drop are p = 0.0 (eval / default config) -> identity.

    # --- P @ V -> (H, TQ, hd), f32 accumulation, then deferred normalization. ---
    pv = jnp.einsum('hqk,hkd->hqd', p.astype(compute_dtype), vh,
                    preferred_element_type=jnp.float32)
    pv = (pv * inv_l).astype(compute_dtype)

    # --- Head recombination + output projection as a single deep matmul:
    # (TQ, C) @ (C, C), contraction depth C, instead of H depth-hd matmuls. ---
    x = pltpu.einshape('hqd->qhd', pv).reshape(tq, C)
    out = jnp.dot(x, wp_ref[...], preferred_element_type=jnp.float32) + bp_ref[...]

    o_ref[0] = out.astype(o_ref.dtype)


def cross_attention(q, v, params, *, num_heads, qk_scale=None,
                    block_q=None, compute_dtype=jnp.bfloat16):
    """q: (B, N, dim), v: (B, NK, dim). Returns (B, N, out_dim)."""
    B, N, dim = q.shape
    _, NK, _ = v.shape
    wq, wk, wv, wp, bp = params            # PyTorch Linear layout: (out, in)
    C = wq.shape[0]
    assert C % num_heads == 0, "out_dim must be divisible by num_heads"
    hd = C // num_heads
    scale = float(qk_scale) if qk_scale is not None else float(hd) ** (-0.5)
    out_dtype = q.dtype

    # Generation-aware VMEM budget: ~80% of physical, capped at 100 MiB
    # (v7x: ~51 MiB of its 64 MiB; v5e/v6e: 100 MiB of their 128 MiB).
    vmem_cap = _vmem_capacity_bytes()
    vmem_limit = min(int(vmem_cap * 0.8), 100 * 1024 * 1024)
    if block_q is None:
        block_q = 512 if vmem_cap >= 96 * 1024 * 1024 else 256

    # Weight prep (done once, outside the kernel):
    #  * (in, out) layout so the kernel does plain x @ W,
    #  * attention scale folded into Wq (in f32, then cast),
    #  * K / V projections fused into one (dim, 2C) matmul,
    #  * flat (C, C) proj weight (head recombination happens as one matmul),
    #  * bf16 matmul operands (f32 accumulation in-kernel).
    wq_t = (wq.T * scale).astype(compute_dtype)                           # (dim, C)
    wkv_t = jnp.concatenate([wk.T, wv.T], axis=1).astype(compute_dtype)   # (dim, 2C)
    wp_t = wp.T.astype(compute_dtype)                                     # (C, C)
    bp_2d = bp.reshape(1, C).astype(jnp.float32)

    # Cast activations once in the wrapper: halves the q / KV DMA bytes and
    # VMEM block footprint, and removes per-tile VALU casts in the kernel.
    q_c = q.astype(compute_dtype)
    v_c = v.astype(compute_dtype)

    tq = N if N <= block_q else block_q      # N-tiling for large sequences
    grid = (B, pl.cdiv(N, tq))

    kernel = functools.partial(_cross_attn_kernel, num_heads=num_heads,
                               out_dim=C, compute_dtype=compute_dtype)

    return pl.pallas_call(
        kernel,
        out_shape=jax.ShapeDtypeStruct((B, N, C), out_dtype),
        grid_spec=pltpu.PrefetchScalarGridSpec(
            num_scalar_prefetch=0,
            grid=grid,
            in_specs=[
                pl.BlockSpec((1, tq, dim), lambda b, n: (b, n, 0)),    # q tile (bf16)
                pl.BlockSpec((1, NK, dim), lambda b, n: (b, 0, 0)),    # kv, full NK (bf16)
                pl.BlockSpec((dim, C), lambda b, n: (0, 0)),           # Wq^T * scale
                pl.BlockSpec((dim, 2 * C), lambda b, n: (0, 0)),       # [Wk^T | Wv^T]
                pl.BlockSpec((C, C), lambda b, n: (0, 0)),             # Wproj^T (flat)
                pl.BlockSpec((1, C), lambda b, n: (0, 0)),             # bproj
            ],
            out_specs=pl.BlockSpec((1, tq, C), lambda b, n: (b, n, 0)),
            scratch_shapes=[pltpu.VMEM((NK, 2 * C), compute_dtype)],   # cached K|V proj
        ),
        compiler_params=pltpu.CompilerParams(
            # q-tile axis must be "arbitrary": the kvp scratch written at n == 0
            # is reused by the later q tiles of the same batch on the same core.
            dimension_semantics=("parallel", "arbitrary"),
            vmem_limit_bytes=vmem_limit,
        ),
    )(q_c, v_c, wq_t, wkv_t, wp_t, bp_2d)


def _reference(q, v, params, *, num_heads, qk_scale=None):
    """Pure-JAX (f32) replica of the PyTorch forward (dropout = identity)."""
    wq, wk, wv, wp, bp = params
    B, N, _ = q.shape
    NK = v.shape[1]
    C = wq.shape[0]
    hd = C // num_heads
    scale = qk_scale if qk_scale is not None else hd ** (-0.5)

    qp = (q @ wq.T).reshape(B, N, num_heads, hd).transpose(0, 2, 1, 3)
    kp = (v @ wk.T).reshape(B, NK, num_heads, hd).transpose(0, 2, 1, 3)
    vp = (v @ wv.T).reshape(B, NK, num_heads, hd).transpose(0, 2, 1, 3)
    attn = (qp @ kp.transpose(0, 1, 3, 2)) * scale
    attn = jax.nn.softmax(attn, axis=-1)
    x = (attn @ vp).transpose(0, 2, 1, 3).reshape(B, N, C)
    return x @ wp.T + bp


if __name__ == "__main__":
    # Small config consistent with the module's forward. C = 128 keeps the
    # output lane-dense; block_q = 8 forces two q tiles per batch so the
    # cached-KV-projection path (n > 0) is exercised.
    B, N, NK = 2, 16, 16
    dim, out_dim, num_heads = 64, 128, 8

    key = jax.random.PRNGKey(0)
    kq, kv_, k1, k2, k3, k4, k5 = jax.random.split(key, 7)

    q = jax.random.normal(kq, (B, N, dim), dtype=jnp.float32)
    v = jax.random.normal(kv_, (B, NK, dim), dtype=jnp.float32)

    # Deterministic params (PyTorch Linear layout: (out_features, in_features)).
    wq = jax.random.normal(k1, (out_dim, dim), dtype=jnp.float32) * 0.05
    wk = jax.random.normal(k2, (out_dim, dim), dtype=jnp.float32) * 0.05
    wv = jax.random.normal(k3, (out_dim, dim), dtype=jnp.float32) * 0.05
    wp = jax.random.normal(k4, (out_dim, out_dim), dtype=jnp.float32) * 0.05
    bp = jax.random.normal(k5, (out_dim,), dtype=jnp.float32) * 0.05
    params = (wq, wk, wv, wp, bp)

    out = cross_attention(q, v, params, num_heads=num_heads, block_q=8)
    out = jax.block_until_ready(out)

    ref = _reference(q, v, params, num_heads=num_heads)
    assert out.shape == (B, N, out_dim)
    # bf16 matmul operands (f32 accumulation) + approx softmax reciprocal ->
    # loosened tolerance vs the f32 reference.
    assert jnp.allclose(out, ref, atol=2e-2, rtol=2e-2), \
        f"max abs err {jnp.max(jnp.abs(out - ref))}"

    print("KERNEL_OK")
</pallas_src>

<mosaic_0001>
module attributes {stable_mosaic.version = 11 : i64} {
  func.func @_cross_attn_kernel(%arg0: i32, %arg1: i32, %arg2: memref<1x8x64xbf16, #tpu.memory_space<vmem>>, %arg3: memref<1x16x64xbf16, #tpu.memory_space<vmem>>, %arg4: memref<64x128xbf16, #tpu.memory_space<vmem>>, %arg5: memref<64x256xbf16, #tpu.memory_space<vmem>>, %arg6: memref<128x128xbf16, #tpu.memory_space<vmem>>, %arg7: memref<1x128xf32, #tpu.memory_space<vmem>>, %arg8: memref<1x8x128xf32, #tpu.memory_space<vmem>>, %arg9: memref<16x256xbf16, #tpu.memory_space<vmem>>) attributes {dimension_semantics = [#tpu.dimension_semantics<parallel>, #tpu.dimension_semantics<arbitrary>], iteration_bounds = array<i64: 2, 2>, scalar_prefetch = 0 : i64, scratch_operands = 1 : i64, tpu.core_type = #tpu.core_type<tc>, window_params = [{transform_indices = @transform_0, window_bounds = array<i64: 1, 8, 64>}, {transform_indices = @transform_1, window_bounds = array<i64: 1, 16, 64>}, {pipeline_mode = #tpu.pipeline_mode<synchronous>, transform_indices = @transform_2, window_bounds = array<i64: 64, 128>}, {pipeline_mode = #tpu.pipeline_mode<synchronous>, transform_indices = @transform_3, window_bounds = array<i64: 64, 256>}, {pipeline_mode = #tpu.pipeline_mode<synchronous>, transform_indices = @transform_4, window_bounds = array<i64: 128, 128>}, {pipeline_mode = #tpu.pipeline_mode<synchronous>, transform_indices = @transform_5, window_bounds = array<i64: 1, 128>}, {transform_indices = @transform_6, window_bounds = array<i64: 1, 8, 128>}]} {
    %c0_i32 = arith.constant 0 : i32
    %0 = arith.cmpi eq, %arg1, %c0_i32 : i32
    %1 = arith.extui %0 : i1 to i32
    %c0_i32_0 = arith.constant 0 : i32
    %2 = arith.cmpi ne, %1, %c0_i32_0 : i32
    scf.if %2 {
      %c0_19 = arith.constant 0 : index
      %c0_20 = arith.constant 0 : index
      %c0_21 = arith.constant 0 : index
      %41 = vector.load %arg3[%c0_19, %c0_20, %c0_21] : memref<1x16x64xbf16, #tpu.memory_space<vmem>>, vector<1x16x64xbf16>
      %42 = vector.shape_cast %41 : vector<1x16x64xbf16> to vector<16x64xbf16>
      %c0_22 = arith.constant 0 : index
      %c0_23 = arith.constant 0 : index
      %43 = vector.load %arg5[%c0_22, %c0_23] : memref<64x256xbf16, #tpu.memory_space<vmem>>, vector<64x256xbf16>
      %cst_24 = arith.constant dense<0.000000e+00> : vector<16x256xf32>
      %44 = tpu.matmul %42, %43, %cst_24 {dimension_numbers = #tpu.dot_dimension_numbers<[1], [0], [0], [1], [0, 0, 1, 1], [], []>} : vector<16x64xbf16>, vector<64x256xbf16>, vector<16x256xf32> -> vector<16x256xf32>
      %45 = arith.truncf %44 : vector<16x256xf32> to vector<16x256xbf16>
      %c0_25 = arith.constant 0 : index
      %c0_26 = arith.constant 0 : index
      %46 = vector.load %arg9[%c0_25, %c0_26] : memref<16x256xbf16, #tpu.memory_space<vmem>>, vector<16x256xbf16>
      tpu.vector_store %arg9[%c0_25, %c0_26], %45 {strides = array<i32>} : memref<16x256xbf16, #tpu.memory_space<vmem>>, vector<16x256xbf16>,
    } else {
    }
    %c0 = arith.constant 0 : index
    %c0_1 = arith.constant 0 : index
    %c0_2 = arith.constant 0 : index
    %3 = vector.load %arg2[%c0, %c0_1, %c0_2] : memref<1x8x64xbf16, #tpu.memory_space<vmem>>, vector<1x8x64xbf16>
    %4 = vector.shape_cast %3 : vector<1x8x64xbf16> to vector<8x64xbf16>
    %c0_3 = arith.constant 0 : index
    %c0_4 = arith.constant 0 : index
    %5 = vector.load %arg4[%c0_3, %c0_4] : memref<64x128xbf16, #tpu.memory_space<vmem>>, vector<64x128xbf16>
    %cst = arith.constant dense<0.000000e+00> : vector<8x128xf32>
    %6 = tpu.matmul %4, %5, %cst {dimension_numbers = #tpu.dot_dimension_numbers<[1], [0], [0], [1], [0, 0, 1, 1], [], []>} : vector<8x64xbf16>, vector<64x128xbf16>, vector<8x128xf32> -> vector<8x128xf32>
    %7 = arith.truncf %6 : vector<8x128xf32> to vector<8x128xbf16>
    %c0_5 = arith.constant 0 : index
    %c0_6 = arith.constant 0 : index
    %8 = vector.load %arg9[%c0_5, %c0_6] : memref<16x256xbf16, #tpu.memory_space<vmem>>, vector<16x256xbf16>
    %9 = vector.shape_cast %7 : vector<8x128xbf16> to vector<8x8x16xbf16>
    %10 = tpu.transpose %9, [1, 0, 2] : vector<8x8x16xbf16> -> vector<8x8x16xbf16>
    %11 = vector.extract_strided_slice %8 {offsets = [0, 0], sizes = [16, 128], strides = [1, 1]} : vector<16x256xbf16> to vector<16x128xbf16>
    %12 = vector.shape_cast %11 : vector<16x128xbf16> to vector<16x8x16xbf16>
    %13 = tpu.transpose %12, [1, 0, 2] : vector<16x8x16xbf16> -> vector<8x16x16xbf16>
    %14 = vector.extract_strided_slice %8 {offsets = [0, 128], sizes = [16, 128], strides = [1, 1]} : vector<16x256xbf16> to vector<16x128xbf16>
    %15 = vector.shape_cast %14 : vector<16x128xbf16> to vector<16x8x16xbf16>
    %16 = tpu.transpose %15, [1, 0, 2] : vector<16x8x16xbf16> -> vector<8x16x16xbf16>
    "tpu.trace_start"() <{level = 10 : i32, message = "hqd,hkd->hqk"}> : () -> ()
    %cst_7 = arith.constant dense<0.000000e+00> : vector<8x8x16xf32>
    %17 = tpu.matmul %10, %13, %cst_7 {dimension_numbers = #tpu.dot_dimension_numbers<[2], [2], [1], [1], [0, 0, 0, 1, 1, 1], [0], [0]>} : vector<8x8x16xbf16>, vector<8x16x16xbf16>, vector<8x8x16xf32> -> vector<8x8x16xf32>
    "tpu.trace_stop"() : () -> ()
    %cst_8 = arith.constant dense<0xFF800000> : vector<8x8xf32>
    %18 = vector.multi_reduction <maximumf>, %17, %cst_8 [2] : vector<8x8x16xf32> to vector<8x8xf32>
    %19 = vector.shape_cast %18 : vector<8x8xf32> to vector<8x8x1xf32>
    %20 = vector.broadcast %19 : vector<8x8x1xf32> to vector<8x8x16xf32>
    %21 = arith.subf %17, %20 : vector<8x8x16xf32>
    %22 = math.exp %21 : vector<8x8x16xf32>
    %cst_9 = arith.constant dense<0.000000e+00> : vector<8x8xf32>
    %23 = vector.multi_reduction <add>, %22, %cst_9 [2] : vector<8x8x16xf32> to vector<8x8xf32>
    %24 = vector.shape_cast %23 : vector<8x8xf32> to vector<8x8x1xf32>
    %25 = tpu.reciprocal %24 {approx = true} : vector<8x8x1xf32> -> vector<8x8x1xf32>
    %26 = arith.truncf %22 : vector<8x8x16xf32> to vector<8x8x16xbf16>
    "tpu.trace_start"() <{level = 10 : i32, message = "hqk,hkd->hqd"}> : () -> ()
    %cst_10 = arith.constant dense<0.000000e+00> : vector<8x8x16xf32>
    %27 = tpu.matmul %26, %16, %cst_10 {dimension_numbers = #tpu.dot_dimension_numbers<[2], [1], [1], [2], [0, 0, 0, 1, 1, 2], [0], [0]>} : vector<8x8x16xbf16>, vector<8x16x16xbf16>, vector<8x8x16xf32> -> vector<8x8x16xf32>
    "tpu.trace_stop"() : () -> ()
    %28 = vector.broadcast %25 : vector<8x8x1xf32> to vector<8x8x16xf32>
    %29 = arith.mulf %27, %28 : vector<8x8x16xf32>
    %30 = arith.truncf %29 : vector<8x8x16xf32> to vector<8x8x16xbf16>
    %31 = tpu.transpose %30, [1, 0, 2] : vector<8x8x16xbf16> -> vector<8x8x16xbf16>
    %32 = vector.shape_cast %31 : vector<8x8x16xbf16> to vector<8x128xbf16>
    %c0_11 = arith.constant 0 : index
    %c0_12 = arith.constant 0 : index
    %33 = vector.load %arg6[%c0_11, %c0_12] : memref<128x128xbf16, #tpu.memory_space<vmem>>, vector<128x128xbf16>
    %cst_13 = arith.constant dense<0.000000e+00> : vector<8x128xf32>
    %34 = tpu.matmul %32, %33, %cst_13 {dimension_numbers = #tpu.dot_dimension_numbers<[1], [0], [0], [1], [0, 0, 1, 1], [], []>} : vector<8x128xbf16>, vector<128x128xbf16>, vector<8x128xf32> -> vector<8x128xf32>
    %c0_14 = arith.constant 0 : index
    %c0_15 = arith.constant 0 : index
    %35 = vector.load %arg7[%c0_14, %c0_15] : memref<1x128xf32, #tpu.memory_space<vmem>>, vector<1x128xf32>
    %36 = vector.broadcast %35 : vector<1x128xf32> to vector<8x128xf32>
    %37 = arith.addf %34, %36 : vector<8x128xf32>
    %c0_16 = arith.constant 0 : index
    %c0_17 = arith.constant 0 : index
    %c0_18 = arith.constant 0 : index
    %38 = vector.load %arg8[%c0_16, %c0_17, %c0_18] : memref<1x8x128xf32, #tpu.memory_space<vmem>>, vector<1x8x128xf32>
    %39 = vector.shape_cast %38 : vector<1x8x128xf32> to vector<8x128xf32>
    %40 = vector.shape_cast %37 : vector<8x128xf32> to vector<1x8x128xf32>
    tpu.vector_store %arg8[%c0_16, %c0_17, %c0_18], %40 {strides = array<i32>} : memref<1x8x128xf32, #tpu.memory_space<vmem>>, vector<1x8x128xf32>,
    return
  }
  func.func @transform_0(%arg0: i32, %arg1: i32) -> (i32, i32, i32) {
    %c0_i32 = arith.constant 0 : i32
    %c0_i32_0 = arith.constant 0 : i32
    return %arg0, %arg1, %c0_i32 : i32, i32, i32
  }
  func.func @transform_1(%arg0: i32, %arg1: i32) -> (i32, i32, i32) {
    %c0_i32 = arith.constant 0 : i32
    %c0_i32_0 = arith.constant 0 : i32
    %c0_i32_1 = arith.constant 0 : i32
    return %arg0, %c0_i32, %c0_i32_0 : i32, i32, i32
  }
  func.func @transform_2(%arg0: i32, %arg1: i32) -> (i32, i32) {
    %c0_i32 = arith.constant 0 : i32
    %c0_i32_0 = arith.constant 0 : i32
    %c0_i32_1 = arith.constant 0 : i32
    return %c0_i32, %c0_i32_0 : i32, i32
  }
  func.func @transform_3(%arg0: i32, %arg1: i32) -> (i32, i32) {
    %c0_i32 = arith.constant 0 : i32
    %c0_i32_0 = arith.constant 0 : i32
    %c0_i32_1 = arith.constant 0 : i32
    return %c0_i32, %c0_i32_0 : i32, i32
  }
  func.func @transform_4(%arg0: i32, %arg1: i32) -> (i32, i32) {
    %c0_i32 = arith.constant 0 : i32
    %c0_i32_0 = arith.constant 0 : i32
    %c0_i32_1 = arith.constant 0 : i32
    return %c0_i32, %c0_i32_0 : i32, i32
  }
  func.func @transform_5(%arg0: i32, %arg1: i32) -> (i32, i32) {
    %c0_i32 = arith.constant 0 : i32
    %c0_i32_0 = arith.constant 0 : i32
    %c0_i32_1 = arith.constant 0 : i32
    return %c0_i32, %c0_i32_0 : i32, i32
  }
  func.func @transform_6(%arg0: i32, %arg1: i32) -> (i32, i32, i32) {
    %c0_i32 = arith.constant 0 : i32
    %c0_i32_0 = arith.constant 0 : i32
    return %arg0, %arg1, %c0_i32 : i32, i32, i32
  }
}

</mosaic_0001>

<llo_original>
// kernel: tpu_custom_call.1
$region0: #{tpu_custom_call.1}
  #allocation0 [shape = 'u32[]', space=smem, size = 0x4, offset = 0x4, fixed_abs, tag = 'smem constant byte address 0x4 - core index']
  #allocation1 [shape = 'u32[72,128]{1,0:T(1,128)}', space=vmem, size = 0x9000, scoped, tag = 'internal scratch']
  #allocation2 [shape = 'bf16[16,256]{1,0:T(8,128)(2,1)}', space=vmem, size = 0x2000, scoped, tag = 'scratch operand']
  %s0 = inlined_call_operand.hbm [shape: bf16[2,16,64], index: 0, kind: input, shape index: {}]
  %s1 = inlined_call_operand.hbm [shape: bf16[2,16,64], index: 1, kind: input, shape index: {}]
  %s2 = inlined_call_operand.hbm [shape: bf16[64,128], index: 2, kind: input, shape index: {}]
  %s3 = inlined_call_operand.hbm [shape: bf16[64,256], index: 3, kind: input, shape index: {}]
  %s4 = inlined_call_operand.hbm [shape: bf16[128,128], index: 4, kind: input, shape index: {}]
  %s5 = inlined_call_operand.vmem [shape: f32[1,128], index: 5, kind: input, shape index: {}]
  %s6 = inlined_call_operand.hbm [shape: f32[2,16,128], index: 6, kind: output, shape index: {}]
  %s7 = sld [smem:[#allocation0]]
  $region81: #{tpu_custom_call.1} parent=0
    _
  %s9 = ssub.s32 1, %s7
  %s10 = scalar_select 0, %s9, %s7
  $region1: #{tpu_custom_call.1} parent=0
    #allocation3 [shape = 'u8[4096]{0}', space=vmem, size = 0x1000, scoped, tag = 'input window, operand 0']
    #allocation4 [shape = 's32[2]{0}', space=sflag, size = 0x8, scoped, tag = 'scoped memory for tpu_custom_call.1']
    #allocation5 [shape = 's32[2]{0}', space=sflag, size = 0x8, scoped, tag = 'scoped memory for tpu_custom_call.1']
    #allocation6 [shape = 'u8[8192]{0}', space=vmem, size = 0x2000, scoped, tag = 'input window, operand 1']
    #allocation7 [shape = 's32[2]{0}', space=sflag, size = 0x8, scoped, tag = 'scoped memory for tpu_custom_call.1']
    #allocation8 [shape = 'u8[16384]{0}', space=vmem, size = 0x4000, scoped, tag = 'input window, operand 2, single buffered']
    #allocation9 [shape = 'u8[32768]{0}', space=vmem, size = 0x8000, scoped, tag = 'input window, operand 3, single buffered']
    #allocation10 [shape = 's32[1]{0}', space=sflag, size = 0x4, scoped, tag = 'scoped memory for tpu_custom_call.1']
    #allocation11 [shape = 'u8[32768]{0}', space=vmem, size = 0x8000, scoped, tag = 'input window, operand 4, single buffered']
    #allocation12 [shape = 'u8[8192]{0}', space=vmem, size = 0x2000, scoped, tag = 'output window, operand 0']
    %11 = vsyncpa [#allocation4], 0
    %s12 = scalar_lea.sflag [#allocation4], 1
    %13 = vsyncpa %s12, 0
    %14 = vsyncpa [#allocation7], 0
    %s15 = scalar_lea.sflag [#allocation7], 1
    %16 = vsyncpa %s15, 0
    %17 = vsyncpa [#allocation10], 0
    %18 = vsyncpa [#allocation5], 0
    %s19 = scalar_lea.sflag [#allocation5], 1
    %20 = vsyncpa %s19, 0
    loop: start=0, step=1, limit=6
    $region2: #{tpu_custom_call.1} parent=1 // loop_pre_header
      _
    $region3: #{tpu_custom_call.1} parent=1 // loop_header
      %s22 = sphi 0, %s26
      %p23 = scmp.ge.s32.totalorder %s22, 6
      %s29 = sphi 0, %s41
      %s30 = sphi 0, %s37
      %s31 = sphi 0, %s29
      %s32 = sphi 0, %s30
      %s33 = sphi 0, %s31
      %s34 = sphi 0, %s32
      %s46 = sphi 0, %s48
      %s49 = sphi 0, %s46
      %s50 = sphi 0, %s49
      %s66 = sphi 0, %s50
      %s72 = sphi 0, %s74
      %s75 = sphi 0, %s72
      %s76 = sphi 0, %s75
      %s92 = sphi 0, %s76
      %s96 = sphi 0, %s96
      %s98 = sphi 0, %s96
      %s99 = sphi 0, %s98
      %s113 = sphi 0, %s99
      %s117 = sphi 0, %s117
      %s119 = sphi 0, %s117
      %s120 = sphi 0, %s119
      %s134 = sphi 0, %s120
      %s138 = sphi 0, %s138
      %s140 = sphi 0, %s138
      %s141 = sphi 0, %s140
      %s155 = sphi 0, %s141
      %s159 = sphi 0, %s159
      %s161 = sphi 0, %s159
      %s162 = sphi 0, %s161
      %s176 = sphi 0, %s162
      %s184 = sphi 0, %s186
      %s187 = sphi 0, %s184
      %s188 = sphi 0, %s187
      %s204 = sphi 0, %s188
    $region4: #{tpu_custom_call.1} parent=1 // loop_header_branch
      %25 = sbr.rel (%p23) target = $region8
    $region5: #{tpu_custom_call.1} parent=1 // loop_body
      %s27 = ssub.s32 %s22, 1
      %s28 = ssub.s32 %s22, 2
      %s35 = sadd.s32 1, %s30
      %p36 = scmp.ge.s32.totalorder %s35, 2
      %s37 = scalar_select %p36, 0, %s35
      %s38 = sadd.s32 1, %s29
      %s39 = scalar_select %p36, %s38, %s29
      %p40 = scmp.ge.s32.totalorder %s39, 2
      %s41 = scalar_select %p40, 0, %s39
      %s42 = ssub.s32 %s29, %s41
      %s43 = ssub.s32 %s30, %s37
      %s44 = sor.u32 %s42, %s43
      %p45 = scmp.eq.s32.totalorder %s44, 0
      %s47 = sadd.s32 %s46, 1
      %s48 = scalar_select %p45, %s46, %s47
      %p51 = pneg %p45
      %p52 = scmp.eq.s32.totalorder %s22, 3
      %p53 = por %p51, %p52
      %p54 = scmp.ne.s32.totalorder %s46, %s49
      %p55 = scmp.eq.s32.totalorder %s22, 0
      %p56 = por %p54, %p55
      %p57 = scmp.ne.s32.totalorder %s46, %s49
      %p58 = scmp.eq.s32.totalorder %s27, 3
      %p59 = por %p57, %p58
      %p60 = scmp.ne.s32.totalorder %s49, %s50
      %p61 = scmp.eq.s32.totalorder %s27, 0
      %p62 = por %p60, %p61
      %p63 = scmp.ne.s32.totalorder %s49, %s50
      %p64 = scmp.eq.s32.totalorder %s28, 3
      %p65 = por %p63, %p64
      %p67 = scmp.ne.s32.totalorder %s50, %s66
      %p68 = scmp.eq.s32.totalorder %s28, 0
      %p69 = por %p67, %p68
      %s70 = ssub.s32 %s29, %s41
      %p71 = scmp.eq.s32.totalorder %s70, 0
      %s73 = sadd.s32 %s72, 1
      %s74 = scalar_select %p71, %s72, %s73
      %p77 = pneg %p71
      %p78 = scmp.eq.s32.totalorder %s22, 3
      %p79 = por %p77, %p78
      %p80 = scmp.ne.s32.totalorder %s72, %s75
      %p81 = scmp.eq.s32.totalorder %s22, 0
      %p82 = por %p80, %p81
      %p83 = scmp.ne.s32.totalorder %s72, %s75
      %p84 = scmp.eq.s32.totalorder %s27, 3
      %p85 = por %p83, %p84
      %p86 = scmp.ne.s32.totalorder %s75, %s76
      %p87 = scmp.eq.s32.totalorder %s27, 0
      %p88 = por %p86, %p87
      %p89 = scmp.ne.s32.totalorder %s75, %s76
      %p90 = scmp.eq.s32.totalorder %s28, 3
      %p91 = por %p89, %p90
      %p93 = scmp.ne.s32.totalorder %s76, %s92
      %p94 = scmp.eq.s32.totalorder %s28, 0
      %p95 = por %p93, %p94
      %s97 = sadd.s32 %s96, 1
      %p100 = scmp.eq.s32.totalorder %s22, 3
      %p101 = scmp.ne.s32.totalorder %s96, %s98
      %p102 = scmp.eq.s32.totalorder %s22, 0
      %p103 = por %p101, %p102
      %p104 = scmp.ne.s32.totalorder %s96, %s98
      %p105 = scmp.eq.s32.totalorder %s27, 3
      %p106 = por %p104, %p105
      %p107 = scmp.ne.s32.totalorder %s98, %s99
      %p108 = scmp.eq.s32.totalorder %s27, 0
      %p109 = por %p107, %p108
      %p110 = scmp.ne.s32.totalorder %s98, %s99
      %p111 = scmp.eq.s32.totalorder %s28, 3
      %p112 = por %p110, %p111
      %p114 = scmp.ne.s32.totalorder %s99, %s113
      %p115 = scmp.eq.s32.totalorder %s28, 0
      %p116 = por %p114, %p115
      %s118 = sadd.s32 %s117, 1
      %p121 = scmp.eq.s32.totalorder %s22, 3
      %p122 = scmp.ne.s32.totalorder %s117, %s119
      %p123 = scmp.eq.s32.totalorder %s22, 0
      %p124 = por %p122, %p123
      %p125 = scmp.ne.s32.totalorder %s117, %s119
      %p126 = scmp.eq.s32.totalorder %s27, 3
      %p127 = por %p125, %p126
      %p128 = scmp.ne.s32.totalorder %s119, %s120
      %p129 = scmp.eq.s32.totalorder %s27, 0
      %p130 = por %p128, %p129
      %p131 = scmp.ne.s32.totalorder %s119, %s120
      %p132 = scmp.eq.s32.totalorder %s28, 3
      %p133 = por %p131, %p132
      %p135 = scmp.ne.s32.totalorder %s120, %s134
      %p136 = scmp.eq.s32.totalorder %s28, 0
      %p137 = por %p135, %p136
      %s139 = sadd.s32 %s138, 1
      %p142 = scmp.eq.s32.totalorder %s22, 3
      %p143 = scmp.ne.s32.totalorder %s138, %s140
      %p144 = scmp.eq.s32.totalorder %s22, 0
      %p145 = por %p143, %p144
      %p146 = scmp.ne.s32.totalorder %s138, %s140
      %p147 = scmp.eq.s32.totalorder %s27, 3
      %p148 = por %p146, %p147
      %p149 = scmp.ne.s32.totalorder %s140, %s141
      %p150 = scmp.eq.s32.totalorder %s27, 0
      %p151 = por %p149, %p150
      %p152 = scmp.ne.s32.totalorder %s140, %s141
      %p153 = scmp.eq.s32.totalorder %s28, 3
      %p154 = por %p152, %p153
      %p156 = scmp.ne.s32.totalorder %s141, %s155
      %p157 = scmp.eq.s32.totalorder %s28, 0
      %p158 = por %p156, %p157
      %s160 = sadd.s32 %s159, 1
      %p163 = scmp.eq.s32.totalorder %s22, 3
      %p164 = scmp.ne.s32.totalorder %s159, %s161
      %p165 = scmp.eq.s32.totalorder %s22, 0
      %p166 = por %p164, %p165
      %p167 = scmp.ne.s32.totalorder %s159, %s161
      %p168 = scmp.eq.s32.totalorder %s27, 3
      %p169 = por %p167, %p168
      %p170 = scmp.ne.s32.totalorder %s161, %s162
      %p171 = scmp.eq.s32.totalorder %s27, 0
      %p172 = por %p170, %p171
      %p173 = scmp.ne.s32.totalorder %s161, %s162
      %p174 = scmp.eq.s32.totalorder %s28, 3
      %p175 = por %p173, %p174
      %p177 = scmp.ne.s32.totalorder %s162, %s176
      %p178 = scmp.eq.s32.totalorder %s28, 0
      %p179 = por %p177, %p178
      %s180 = ssub.s32 %s29, %s41
      %s181 = ssub.s32 %s30, %s37
      %s182 = sor.u32 %s180, %s181
      %p183 = scmp.eq.s32.totalorder %s182, 0
      %s185 = sadd.s32 %s184, 1
      %s186 = scalar_select %p183, %s184, %s185
      %p189 = pneg %p183
      %p190 = scmp.eq.s32.totalorder %s22, 3
      %p191 = por %p189, %p190
      %p192 = scmp.ne.s32.totalorder %s184, %s187
      %p193 = scmp.eq.s32.totalorder %s22, 0
      %p194 = por %p192, %p193
      %p195 = scmp.ne.s32.totalorder %s184, %s187
      %p196 = scmp.eq.s32.totalorder %s27, 3
      %p197 = por %p195, %p196
      %p198 = scmp.ne.s32.totalorder %s187, %s188
      %p199 = scmp.eq.s32.totalorder %s27, 0
      %p200 = por %p198, %p199
      %p201 = scmp.ne.s32.totalorder %s187, %s188
      %p202 = scmp.eq.s32.totalorder %s28, 3
      %p203 = por %p201, %p202
      %p205 = scmp.ne.s32.totalorder %s188, %s204
      %p206 = scmp.eq.s32.totalorder %s28, 0
      %p207 = por %p205, %p206
      %p208 = scmp.le.s32.totalorder 1, %s22
      %p209 = scmp.lt.s32.totalorder %s22, 5
      %p210 = pnand %p208, %p209
      %p211 = pneg %p210
      // Predicated region
      $region9: #{tpu_custom_call.1} parent=5 // pred_check
        _
      $region10: #{tpu_custom_call.1} parent=5 // pred_check_branch
        %213 = sbr.rel (%p210) target = $region12
      $region11: #{tpu_custom_call.1} parent=5 // pred_region
        %s214 = ssub.s32 %s22, 1
        // Predicated region
        $region13: #{tpu_custom_call.1} parent=11 // pred_check
          %p215 = pneg %p109
        $region14: #{tpu_custom_call.1} parent=11 // pred_check_branch
          %217 = sbr.rel (%p215) target = $region16
        $region15: #{tpu_custom_call.1} parent=11 // pred_region
          %219 = vsyncadd [#allocation7], 0
          %s220 = sshll.u32 %s2, 4
          %s221 = int_to_ptr.hbm [resolvable:$true] %s220
          %s222 = sshll.u32 [#allocation8], 4
          %s223 = int_to_ptr.vmem [resolvable:$true] %s222
          %228 = dma.hbm_to_vmem [thread:$0]  %s221, 512, %s223, [#allocation7], 64, 64, 4
        $region16: #{tpu_custom_call.1} parent=11 // pred_fallthru
          _
        // Predicated region
        $region17: #{tpu_custom_call.1} parent=11 // pred_check
          %p229 = pneg %p130
        $region18: #{tpu_custom_call.1} parent=11 // pred_check_branch
          %231 = sbr.rel (%p229) target = $region20
        $region19: #{tpu_custom_call.1} parent=11 // pred_region
          %233 = vsyncadd [#allocation10], 0
          %s234 = sshll.u32 %s3, 4
          %s235 = int_to_ptr.hbm [resolvable:$true] %s234
          %s236 = sshll.u32 [#allocation9], 4
          %s237 = int_to_ptr.vmem [resolvable:$true] %s236
          %242 = dma.hbm_to_vmem [thread:$0]  %s235, 1024, %s237, [#allocation10], 128, 128, 8
        $region20: #{tpu_custom_call.1} parent=11 // pred_fallthru
          _
        // Predicated region
        $region21: #{tpu_custom_call.1} parent=11 // pred_check
          %p243 = pneg %p151
        $region22: #{tpu_custom_call.1} parent=11 // pred_check_branch
          %245 = sbr.rel (%p243) target = $region24
        $region23: #{tpu_custom_call.1} parent=11 // pred_region
          %247 = vsyncadd [#allocation10], 0
          %s248 = sshll.u32 %s4, 4
          %s249 = int_to_ptr.hbm [resolvable:$true] %s248
          %s250 = sshll.u32 [#allocation11], 4
          %s251 = int_to_ptr.vmem [resolvable:$true] %s250
          %256 = dma.hbm_to_vmem [thread:$0]  %s249, 1024, %s251, [#allocation10], 64, 64, 4
        $region24: #{tpu_custom_call.1} parent=11 // pred_fallthru
          _
        // Predicated region
        $region25: #{tpu_custom_call.1} parent=11 // pred_check
          %p257 = pneg %p172
        $region26: #{tpu_custom_call.1} parent=11 // pred_check_branch
          %259 = sbr.rel (%p257) target = $region28
        $region27: #{tpu_custom_call.1} parent=11 // pred_region
          _
        $region28: #{tpu_custom_call.1} parent=11 // pred_fallthru
          _
      $region12: #{tpu_custom_call.1} parent=5 // pred_fallthru
        _
      %p260 = scmp.lt.s32.totalorder %s22, 4
      // Predicated region
      $region29: #{tpu_custom_call.1} parent=5 // pred_check
        %p261 = pneg %p260
      $region30: #{tpu_custom_call.1} parent=5 // pred_check_branch
        %263 = sbr.rel (%p261) target = $region32
      $region31: #{tpu_custom_call.1} parent=5 // pred_region
        // Predicated region
        $region33: #{tpu_custom_call.1} parent=31 // pred_check
          %p264 = pneg %p56
        $region34: #{tpu_custom_call.1} parent=31 // pred_check_branch
          %266 = sbr.rel (%p264) target = $region36
        $region35: #{tpu_custom_call.1} parent=31 // pred_region
          %s267 = sand.u32 %s46, 1
          %s268 = scalar_lea.sflag [#allocation4], %s267
          %s269 = sand.u32 %s46, 1
          %s270 = smul.addr %s269, 4
          %s271 = scalar_lea.vmem [#allocation3], %s270
          %273 = vsyncadd %s268, 0
          %s274 = smul.addr %s29, 2
          %s275 = sadd.s32 %s30, %s274
          %s276 = smul.addr %s275, 4
          %s277 = scalar_lea.hbm %s0, %s276
          %s279 = sshll.u32 %s277, 4
          %s280 = int_to_ptr.hbm [resolvable:$true] %s279
          %s281 = sshll.u32 %s271, 4
          %s282 = int_to_ptr.vmem [resolvable:$true] %s281
          %284 = dma.hbm_to_vmem [thread:$0]  %s280, 64, %s282, %s268
        $region36: #{tpu_custom_call.1} parent=31 // pred_fallthru
          _
        // Predicated region
        $region37: #{tpu_custom_call.1} parent=31 // pred_check
          %p285 = pneg %p82
        $region38: #{tpu_custom_call.1} parent=31 // pred_check_branch
          %287 = sbr.rel (%p285) target = $region40
        $region39: #{tpu_custom_call.1} parent=31 // pred_region
          %s288 = sand.u32 %s22, 1
          %s289 = scalar_lea.sflag [#allocation7], %s288
          %s290 = sand.u32 %s72, 1
          %s291 = smul.addr %s290, 8
          %s292 = scalar_lea.vmem [#allocation6], %s291
          %294 = vsyncadd %s289, 0
          %s295 = smul.addr %s29, 2
          %s296 = smul.addr %s295, 4
          %s297 = scalar_lea.hbm %s1, %s296
          %s298 = sshll.u32 %s297, 4
          %s299 = int_to_ptr.hbm [resolvable:$true] %s298
          %s300 = sshll.u32 %s292, 4
          %s301 = int_to_ptr.vmem [resolvable:$true] %s300
          %306 = dma.hbm_to_vmem [thread:$0]  %s299, 128, %s301, %s289, 64, 64, 4
        $region40: #{tpu_custom_call.1} parent=31 // pred_fallthru
          _
      $region32: #{tpu_custom_call.1} parent=5 // pred_fallthru
        _
      %p307 = scmp.le.s32.totalorder 1, %s22
      %p308 = scmp.lt.s32.totalorder %s22, 5
      %p309 = pnand %p307, %p308
      %p310 = pneg %p309
      // Predicated region
      $region41: #{tpu_custom_call.1} parent=5 // pred_check
        _
      $region42: #{tpu_custom_call.1} parent=5 // pred_check_branch
        %312 = sbr.rel (%p309) target = $region44
      $region43: #{tpu_custom_call.1} parent=5 // pred_region
        %s313 = ssub.s32 %s22, 1
        %s314 = sand.u32 %s49, 1
        %s315 = scalar_lea.sflag [#allocation4], %s314
        %s316 = sand.u32 %s49, 1
        %s317 = smul.addr %s316, 4
        %s318 = scalar_lea.vmem [#allocation3], %s317
        // Predicated region
        $region45: #{tpu_custom_call.1} parent=43 // pred_check
          %p319 = pneg %p62
        $region46: #{tpu_custom_call.1} parent=43 // pred_check_branch
          %321 = sbr.rel (%p319) target = $region48
        $region47: #{tpu_custom_call.1} parent=43 // pred_region
          %323 = dma.done %s315, 64
        $region48: #{tpu_custom_call.1} parent=43 // pred_fallthru
          _
        %s324 = sand.u32 %s27, 1
        %s325 = scalar_lea.sflag [#allocation7], %s324
        %s326 = sand.u32 %s75, 1
        %s327 = smul.addr %s326, 8
        %s328 = scalar_lea.vmem [#allocation6], %s327
        // Predicated region
        $region49: #{tpu_custom_call.1} parent=43 // pred_check
          %p329 = pneg %p88
        $region50: #{tpu_custom_call.1} parent=43 // pred_check_branch
          %331 = sbr.rel (%p329) target = $region52
        $region51: #{tpu_custom_call.1} parent=43 // pred_region
          %333 = dma.done %s325, 128
        $region52: #{tpu_custom_call.1} parent=43 // pred_fallthru
          _
        // Predicated region
        $region53: #{tpu_custom_call.1} parent=43 // pred_check
          %p334 = pneg %p109
        $region54: #{tpu_custom_call.1} parent=43 // pred_check_branch
          %336 = sbr.rel (%p334) target = $region56
        $region55: #{tpu_custom_call.1} parent=43 // pred_region
          %338 = dma.done [#allocation7], 512
        $region56: #{tpu_custom_call.1} parent=43 // pred_fallthru
          _
        // Predicated region
        $region57: #{tpu_custom_call.1} parent=43 // pred_check
          %p339 = pneg %p130
        $region58: #{tpu_custom_call.1} parent=43 // pred_check_branch
          %341 = sbr.rel (%p339) target = $region60
        $region59: #{tpu_custom_call.1} parent=43 // pred_region
          %343 = dma.done [#allocation10], 1024
        $region60: #{tpu_custom_call.1} parent=43 // pred_fallthru
          _
        // Predicated region
        $region61: #{tpu_custom_call.1} parent=43 // pred_check
          %p344 = pneg %p151
        $region62: #{tpu_custom_call.1} parent=43 // pred_check_branch
          %346 = sbr.rel (%p344) target = $region64
        $region63: #{tpu_custom_call.1} parent=43 // pred_region
          %348 = dma.done [#allocation10], 1024
        $region64: #{tpu_custom_call.1} parent=43 // pred_fallthru
          _
        %s349 = sand.u32 %s49, 1
        %s350 = scalar_lea.sflag [#allocation4], %s349
        %s351 = sand.u32 %s49, 1
        %s352 = smul.addr %s351, 4
        %s353 = scalar_lea.vmem [#allocation3], %s352
        %p354 = pneg %p62
        %p355 = pneg %p59
        %s356 = sand.u32 %s27, 1
        %s357 = scalar_lea.sflag [#allocation7], %s356
        %s358 = sand.u32 %s75, 1
        %s359 = smul.addr %s358, 8
        %s360 = scalar_lea.vmem [#allocation6], %s359
        %p361 = pneg %p88
        %p362 = pneg %p85
        %p363 = pneg %p109
        %p364 = pneg %p106
        %p365 = pneg %p130
        %p366 = pneg %p127
        %p367 = pneg %p151
        %p368 = pneg %p148
        %p369 = pneg %p172
        %p370 = pneg %p169
        %p371 = pneg %p200
        %p372 = pneg %p197
        %s373 = sand.u32 %s187, 1
        %s374 = scalar_lea.sflag [#allocation5], %s373
        %s375 = sand.u32 %s187, 1
        %s376 = smul.addr %s375, 8
        %s377 = scalar_lea.vmem [#allocation12], %s376
        %p379 = scmp.eq.s32.totalorder %s32, 0
        // Predicated region
        $region65: #{tpu_custom_call.1} parent=43 // pred_check
          %p380 = pneg %p379
        $region66: #{tpu_custom_call.1} parent=43 // pred_check_branch
          %382 = sbr.rel (%p380) target = $region68
        $region67: #{tpu_custom_call.1} parent=43 // pred_region
          %v383 = vld [vmem:[%s328] sm:$0xf]
          %v384 = vld [vmem:[%s328 + $0x4] sm:$0xf]
          %v385 = vld [vmem:[#allocation9] sm:$0xff]
          %v386 = vld [vmem:[#allocation9 + $0x8] sm:$0xff]
          %v387 = vld [vmem:[#allocation9 + $0x10] sm:$0xff]
          %v388 = vld [vmem:[#allocation9 + $0x18] sm:$0xff]
          %v389 = vld [vmem:[#allocation9 + $0x20] sm:$0xff]
          %v390 = vld [vmem:[#allocation9 + $0x28] sm:$0xff]
          %v391 = vld [vmem:[#allocation9 + $0x30] sm:$0xff]
          %v392 = vld [vmem:[#allocation9 + $0x38] sm:$0xff]
          %v395 = vunpack.c.l.b16 %v383
          %v396 = vunpack.c.l.b16 %v384
          %v397 = vpack.c.b16 %v396, %v395
          %v406 = vunpack.c.l.b16 %v385
          %v407 = vunpack.c.h.b16 %v385
          %v408 = vunpack.c.l.b16 %v386
          %v409 = vunpack.c.h.b16 %v386
          %v410 = vunpack.c.l.b16 %v387
          %v411 = vunpack.c.h.b16 %v387
          %v412 = vunpack.c.l.b16 %v388
          %v413 = vunpack.c.h.b16 %v388
          %v414 = vunpack.c.l.b16 %v389
          %v415 = vunpack.c.h.b16 %v389
          %v416 = vunpack.c.l.b16 %v390
          %v417 = vunpack.c.h.b16 %v390
          %v418 = vunpack.c.l.b16 %v391
          %v419 = vunpack.c.h.b16 %v391
          %v420 = vunpack.c.l.b16 %v392
          %v421 = vunpack.c.h.b16 %v392
          %v422 = vpack.c.b16 %v408, %v406
          %v423 = vpack.c.b16 %v409, %v407
          %v424 = vpack.c.b16 %v412, %v410
          %v425 = vpack.c.b16 %v413, %v411
          %v426 = vpack.c.b16 %v416, %v414
          %v427 = vpack.c.b16 %v417, %v415
          %v428 = vpack.c.b16 %v420, %v418
          %v429 = vpack.c.b16 %v421, %v419
          %vm438 = vcmask 523264
          %v440 = vsel %vm438, %v397, 0
          %442 = vmatpush.bf16.msra.mxu0 0
          %443 = vmatpush.bf16.msra.mxu0 0
          %444 = vmatpush.bf16.msra.mxu0 0
          %445 = vmatpush.bf16.msra.mxu0 0
          %446 = vmatpush.bf16.msra.mxu0 %v428
          %447 = vmatpush.bf16.msra.mxu0 %v426
          %448 = vmatpush.bf16.msra.mxu0 %v424
          %449 = vmatpush.bf16.msra.mxu0 %v422
          %450 = vmatmul.bf16.gmra.mxu0 %v440
          %v451 = vpop.f32.mrf.mxu0
          %v452 = vadd.f32 0.0, %v451
          %v453 = vpop.f32.mrf.mxu0
          %v454 = vadd.f32 0.0, %v453
          %455 = vdwg.mxu0
          %456 = vmatpush.bf16.msra.mxu0 0
          %457 = vmatpush.bf16.msra.mxu0 0
          %458 = vmatpush.bf16.msra.mxu0 0
          %459 = vmatpush.bf16.msra.mxu0 0
          %460 = vmatpush.bf16.msra.mxu0 %v429
          %461 = vmatpush.bf16.msra.mxu0 %v427
          %462 = vmatpush.bf16.msra.mxu0 %v425
          %463 = vmatpush.bf16.msra.mxu0 %v423
          %464 = vmatmul.bf16.gmra.mxu0 %v440
          %v465 = vpop.f32.mrf.mxu0
          %v466 = vadd.f32 0.0, %v465
          %v467 = vpop.f32.mrf.mxu0
          %v468 = vadd.f32 0.0, %v467
          %469 = vdwg.mxu0
          %v470 = vpack.c.bf16 %v466, %v452
          %v471 = vpack.c.bf16 %v468, %v454
          %472 = vst [vmem:[#allocation2] sm:$0xff] %v470
          %473 = vst [vmem:[#allocation2 + $0x8] sm:$0xff] %v471
        $region68: #{tpu_custom_call.1} parent=43 // pred_fallthru
          _
        %v474 = vld [vmem:[%s318] sm:$0xf]
        %v475 = vld [vmem:[#allocation8] sm:$0xf]
        %v476 = vld [vmem:[#allocation8 + $0x4] sm:$0xf]
        %v477 = vld [vmem:[#allocation8 + $0x8] sm:$0xf]
        %v478 = vld [vmem:[#allocation8 + $0xc] sm:$0xf]
        %v479 = vld [vmem:[#allocation8 + $0x10] sm:$0xf]
        %v480 = vld [vmem:[#allocation8 + $0x14] sm:$0xf]
        %v481 = vld [vmem:[#allocation8 + $0x18] sm:$0xf]
        %v482 = vld [vmem:[#allocation8 + $0x1c] sm:$0xf]
        %v491 = vunpack.c.l.b16 %v475
        %v492 = vunpack.c.l.b16 %v476
        %v493 = vunpack.c.l.b16 %v477
        %v494 = vunpack.c.l.b16 %v478
        %v495 = vunpack.c.l.b16 %v479
        %v496 = vunpack.c.l.b16 %v480
        %v497 = vunpack.c.l.b16 %v481
        %v498 = vunpack.c.l.b16 %v482
        %v499 = vpack.c.b16 %v492, %v491
        %v500 = vpack.c.b16 %v494, %v493
        %v501 = vpack.c.b16 %v496, %v495
        %v502 = vpack.c.b16 %v498, %v497
        %vm507 = vcmask 523264
        %v509 = vsel %vm507, %v474, 0
        %511 = vmatpush.bf16.msra.mxu0 0
        %512 = vmatpush.bf16.msra.mxu0 0
        %513 = vmatpush.bf16.msra.mxu0 0
        %514 = vmatpush.bf16.msra.mxu0 0
        %515 = vmatpush.bf16.msra.mxu0 %v502
        %516 = vmatpush.bf16.msra.mxu0 %v501
        %517 = vmatpush.bf16.msra.mxu0 %v500
        %518 = vmatpush.bf16.msra.mxu0 %v499
        %519 = vmatmul.bf16.gmra.mxu0 %v509
        %v520 = vpop.f32.mrf.mxu0
        %v521 = vadd.f32 0.0, %v520
        %v522 = vpop.f32.mrf.mxu0
        %523 = vdwg.mxu0
        %v524 = vpack.c.bf16 %v521, %v521
        %v525 = vld [vmem:[#allocation2] sm:$0xff]
        %v526 = vld [vmem:[#allocation2 + $0x8] sm:$0xff]
        %528 = vrot.lane.b32.xlu0 %v524, 112
        %v529 = vpop.permute.xlu0 %528
        %531 = vrot.lane.b32.xlu0 %v524, 96
        %v532 = vpop.permute.xlu0 %531
        %534 = vrot.lane.b32.xlu0 %v524, 80
        %v535 = vpop.permute.xlu0 %534
        %537 = vrot.lane.b32.xlu0 %v524, 64
        %v538 = vpop.permute.xlu0 %537
        %540 = vrot.lane.b32.xlu0 %v524, 48
        %v541 = vpop.permute.xlu0 %540
        %543 = vrot.lane.b32.xlu0 %v524, 32
        %v544 = vpop.permute.xlu0 %543
        %546 = vrot.lane.b32.xlu0 %v524, 16
        %v547 = vpop.permute.xlu0 %546
        %v549 = vrot.slane %v538, 4
        %vm550 = vcmask 1047556
        %v551 = vsel %vm550, %v549, %v524
        %v553 = vunpack.c.l.s4 1983009808
        %v554 = vunpack.c.0.s8 %v553
        %v555 = vperm.slane %v551, %v554
        %v556 = vrot.slane %v544, 4
        %v557 = vsel %vm550, %v556, %v532
        %v559 = vunpack.c.l.s4 1983009808
        %v560 = vunpack.c.0.s8 %v559
        %v561 = vperm.slane %v557, %v560
        %v562 = vrot.slane %v561, 4
        %v563 = vsel %vm550, %v562, %v555
        %v564 = vrot.slane %v555, 4
        %v565 = vsel %vm550, %v561, %v564
        %v567 = vunpack.c.l.s4 1934713408
        %v568 = vunpack.c.0.s8 %v567
        %v569 = vperm.slane %v563, %v568
        %v571 = vunpack.c.l.s4 1934713408
        %v572 = vunpack.c.0.s8 %v571
        %v573 = vperm.slane %v565, %v572
        %v574 = vrot.slane %v569, 4
        %v575 = vsel %vm550, 0, %v574
        %v576 = vrot.slane %v573, 4
        %v577 = vsel %vm550, 0, %v576
        %v578 = vrot.slane %v541, 4
        %v579 = vsel %vm550, %v578, %v529
        %v581 = vunpack.c.l.s4 1983009808
        %v582 = vunpack.c.0.s8 %v581
        %v583 = vperm.slane %v579, %v582
        %v584 = vrot.slane %v547, 4
        %v585 = vsel %vm550, %v584, %v535
        %v587 = vunpack.c.l.s4 1983009808
        %v588 = vunpack.c.0.s8 %v587
        %v589 = vperm.slane %v585, %v588
        %v590 = vrot.slane %v589, 4
        %v591 = vsel %vm550, %v590, %v583
        %v592 = vrot.slane %v583, 4
        %v593 = vsel %vm550, %v589, %v592
        %v595 = vunpack.c.l.s4 1934713408
        %v596 = vunpack.c.0.s8 %v595
        %v597 = vperm.slane %v591, %v596
        %v599 = vunpack.c.l.s4 1934713408
        %v600 = vunpack.c.0.s8 %v599
        %v601 = vperm.slane %v593, %v600
        %v602 = vrot.slane %v597, 4
        %v603 = vsel %vm550, 0, %v602
        %v604 = vrot.slane %v601, 4
        %v605 = vsel %vm550, 0, %v604
        %v608 = vpack.i.b16 %v597, %v569
        %v610 = vshrl.u32 %v569, 16
        %v611 = vshrl.u32 %v597, 16
        %v612 = vpack.i.b16 %v611, %v610
        %v616 = vpack.i.b16 %v603, %v575
        %v618 = vshrl.u32 %v575, 16
        %v619 = vshrl.u32 %v603, 16
        %v620 = vpack.i.b16 %v619, %v618
        %v624 = vpack.i.b16 %v601, %v573
        %v626 = vshrl.u32 %v573, 16
        %v627 = vshrl.u32 %v601, 16
        %v628 = vpack.i.b16 %v627, %v626
        %v632 = vpack.i.b16 %v605, %v577
        %v634 = vshrl.u32 %v577, 16
        %v635 = vshrl.u32 %v605, 16
        %v636 = vpack.i.b16 %v635, %v634
        %v638 = vrot.slane %v624, 4
        %v639 = vsel %vm550, %v638, %v608
        %v641 = vunpack.c.l.s4 1983009808
        %v642 = vunpack.c.0.s8 %v641
        %v643 = vperm.slane %v639, %v642
        %v644 = vrot.slane %v632, 4
        %v645 = vsel %vm550, %v644, %v616
        %v647 = vunpack.c.l.s4 1983009808
        %v648 = vunpack.c.0.s8 %v647
        %v649 = vperm.slane %v645, %v648
        %v650 = vrot.slane %v649, 4
        %v651 = vsel %vm550, %v650, %v643
        %v652 = vrot.slane %v643, 4
        %v653 = vsel %vm550, %v649, %v652
        %v655 = vunpack.c.l.s4 1934713408
        %v656 = vunpack.c.0.s8 %v655
        %v657 = vperm.slane %v651, %v656
        %v659 = vunpack.c.l.s4 1934713408
        %v660 = vunpack.c.0.s8 %v659
        %v661 = vperm.slane %v653, %v660
        %v662 = vrot.slane %v657, 4
        %v663 = vsel %vm550, 0, %v662
        %v664 = vrot.slane %v661, 4
        %v665 = vsel %vm550, 0, %v664
        %v666 = vrot.slane %v628, 4
        %v667 = vsel %vm550, %v666, %v612
        %v669 = vunpack.c.l.s4 1983009808
        %v670 = vunpack.c.0.s8 %v669
        %v671 = vperm.slane %v667, %v670
        %v672 = vrot.slane %v636, 4
        %v673 = vsel %vm550, %v672, %v620
        %v675 = vunpack.c.l.s4 1983009808
        %v676 = vunpack.c.0.s8 %v675
        %v677 = vperm.slane %v673, %v676
        %v678 = vrot.slane %v677, 4
        %v679 = vsel %vm550, %v678, %v671
        %v680 = vrot.slane %v671, 4
        %v681 = vsel %vm550, %v677, %v680
        %v683 = vunpack.c.l.s4 1934713408
        %v684 = vunpack.c.0.s8 %v683
        %v685 = vperm.slane %v679, %v684
        %v687 = vunpack.c.l.s4 1934713408
        %v688 = vunpack.c.0.s8 %v687
        %v689 = vperm.slane %v681, %v688
        %v690 = vrot.slane %v685, 4
        %v691 = vsel %vm550, 0, %v690
        %v692 = vrot.slane %v689, 4
        %v693 = vsel %vm550, 0, %v692
        %v696 = vpack.i.b16 %v685, %v657
        %v697 = vshrl.u32 %v657, 16
        %v698 = vshrl.u32 %v685, 16
        %v699 = vpack.i.b16 %v698, %v697
        %v702 = vpack.i.b16 %v691, %v663
        %v703 = vshrl.u32 %v663, 16
        %v704 = vshrl.u32 %v691, 16
        %v705 = vpack.i.b16 %v704, %v703
        %v708 = vpack.i.b16 %v689, %v661
        %v709 = vshrl.u32 %v661, 16
        %v710 = vshrl.u32 %v689, 16
        %v711 = vpack.i.b16 %v710, %v709
        %v714 = vpack.i.b16 %v693, %v665
        %v715 = vshrl.u32 %v665, 16
        %v716 = vshrl.u32 %v693, 16
        %v717 = vpack.i.b16 %v716, %v715
        %720 = vrot.lane.b32.xlu0 %v525, 112
        %v721 = vpop.permute.xlu0 %720
        %722 = vrot.lane.b32.xlu0 %v526, 112
        %v723 = vpop.permute.xlu0 %722
        %726 = vrot.lane.b32.xlu0 %v525, 96
        %v727 = vpop.permute.xlu0 %726
        %728 = vrot.lane.b32.xlu0 %v526, 96
        %v729 = vpop.permute.xlu0 %728
        %732 = vrot.lane.b32.xlu0 %v525, 80
        %v733 = vpop.permute.xlu0 %732
        %734 = vrot.lane.b32.xlu0 %v526, 80
        %v735 = vpop.permute.xlu0 %734
        %738 = vrot.lane.b32.xlu0 %v525, 64
        %v739 = vpop.permute.xlu0 %738
        %740 = vrot.lane.b32.xlu0 %v526, 64
        %v741 = vpop.permute.xlu0 %740
        %744 = vrot.lane.b32.xlu0 %v525, 48
        %v745 = vpop.permute.xlu0 %744
        %746 = vrot.lane.b32.xlu0 %v526, 48
        %v747 = vpop.permute.xlu0 %746
        %750 = vrot.lane.b32.xlu0 %v525, 32
        %v751 = vpop.permute.xlu0 %750
        %752 = vrot.lane.b32.xlu0 %v526, 32
        %v753 = vpop.permute.xlu0 %752
        %756 = vrot.lane.b32.xlu0 %v525, 16
        %v757 = vpop.permute.xlu0 %756
        %758 = vrot.lane.b32.xlu0 %v526, 16
        %v759 = vpop.permute.xlu0 %758
        %v762 = vrot.slane %v739, 4
        %v763 = vsel %vm550, %v762, %v525
        %v765 = vunpack.c.l.s4 1983009808
        %v766 = vunpack.c.0.s8 %v765
        %v767 = vperm.slane %v763, %v766
        %v768 = vrot.slane %v751, 4
        %v769 = vsel %vm550, %v768, %v727
        %v771 = vunpack.c.l.s4 1983009808
        %v772 = vunpack.c.0.s8 %v771
        %v773 = vperm.slane %v769, %v772
        %v774 = vrot.slane %v773, 4
        %v775 = vsel %vm550, %v774, %v767
        %v776 = vrot.slane %v767, 4
        %v777 = vsel %vm550, %v773, %v776
        %v779 = vunpack.c.l.s4 1934713408
        %v780 = vunpack.c.0.s8 %v779
        %v781 = vperm.slane %v775, %v780
        %v783 = vunpack.c.l.s4 1934713408
        %v784 = vunpack.c.0.s8 %v783
        %v785 = vperm.slane %v777, %v784
        %v786 = vrot.slane %v781, 4
        %v787 = vsel %vm550, 0, %v786
        %v788 = vrot.slane %v785, 4
        %v789 = vsel %vm550, 0, %v788
        %v790 = vrot.slane %v745, 4
        %v791 = vsel %vm550, %v790, %v721
        %v793 = vunpack.c.l.s4 1983009808
        %v794 = vunpack.c.0.s8 %v793
        %v795 = vperm.slane %v791, %v794
        %v796 = vrot.slane %v757, 4
        %v797 = vsel %vm550, %v796, %v733
        %v799 = vunpack.c.l.s4 1983009808
        %v800 = vunpack.c.0.s8 %v799
        %v801 = vperm.slane %v797, %v800
        %v802 = vrot.slane %v801, 4
        %v803 = vsel %vm550, %v802, %v795
        %v804 = vrot.slane %v795, 4
        %v805 = vsel %vm550, %v801, %v804
        %v807 = vunpack.c.l.s4 1934713408
        %v808 = vunpack.c.0.s8 %v807
        %v809 = vperm.slane %v803, %v808
        %v811 = vunpack.c.l.s4 1934713408
        %v812 = vunpack.c.0.s8 %v811
        %v813 = vperm.slane %v805, %v812
        %v814 = vrot.slane %v809, 4
        %v815 = vsel %vm550, 0, %v814
        %v816 = vrot.slane %v813, 4
        %v817 = vsel %vm550, 0, %v816
        %v818 = vrot.slane %v741, 4
        %v819 = vsel %vm550, %v818, %v526
        %v821 = vunpack.c.l.s4 1983009808
        %v822 = vunpack.c.0.s8 %v821
        %v823 = vperm.slane %v819, %v822
        %v824 = vrot.slane %v753, 4
        %v825 = vsel %vm550, %v824, %v729
        %v827 = vunpack.c.l.s4 1983009808
        %v828 = vunpack.c.0.s8 %v827
        %v829 = vperm.slane %v825, %v828
        %v830 = vrot.slane %v829, 4
        %v831 = vsel %vm550, %v830, %v823
        %v832 = vrot.slane %v823, 4
        %v833 = vsel %vm550, %v829, %v832
        %v835 = vunpack.c.l.s4 1934713408
        %v836 = vunpack.c.0.s8 %v835
        %v837 = vperm.slane %v831, %v836
        %v839 = vunpack.c.l.s4 1934713408
        %v840 = vunpack.c.0.s8 %v839
        %v841 = vperm.slane %v833, %v840
        %v842 = vrot.slane %v837, 4
        %v843 = vsel %vm550, 0, %v842
        %v844 = vrot.slane %v841, 4
        %v845 = vsel %vm550, 0, %v844
        %v846 = vrot.slane %v747, 4
        %v847 = vsel %vm550, %v846, %v723
        %v849 = vunpack.c.l.s4 1983009808
        %v850 = vunpack.c.0.s8 %v849
        %v851 = vperm.slane %v847, %v850
        %v852 = vrot.slane %v759, 4
        %v853 = vsel %vm550, %v852, %v735
        %v855 = vunpack.c.l.s4 1983009808
        %v856 = vunpack.c.0.s8 %v855
        %v857 = vperm.slane %v853, %v856
        %v858 = vrot.slane %v857, 4
        %v859 = vsel %vm550, %v858, %v851
        %v860 = vrot.slane %v851, 4
        %v861 = vsel %vm550, %v857, %v860
        %v863 = vunpack.c.l.s4 1934713408
        %v864 = vunpack.c.0.s8 %v863
        %v865 = vperm.slane %v859, %v864
        %v867 = vunpack.c.l.s4 1934713408
        %v868 = vunpack.c.0.s8 %v867
        %v869 = vperm.slane %v861, %v868
        %v870 = vrot.slane %v865, 4
        %v871 = vsel %vm550, 0, %v870
        %v872 = vrot.slane %v869, 4
        %v873 = vsel %vm550, 0, %v872
        %v876 = vpack.i.b16 %v809, %v781
        %v878 = vshrl.u32 %v781, 16
        %v879 = vshrl.u32 %v809, 16
        %v880 = vpack.i.b16 %v879, %v878
        %v884 = vpack.i.b16 %v815, %v787
        %v886 = vshrl.u32 %v787, 16
        %v887 = vshrl.u32 %v815, 16
        %v888 = vpack.i.b16 %v887, %v886
        %v892 = vpack.i.b16 %v813, %v785
        %v894 = vshrl.u32 %v785, 16
        %v895 = vshrl.u32 %v813, 16
        %v896 = vpack.i.b16 %v895, %v894
        %v900 = vpack.i.b16 %v817, %v789
        %v902 = vshrl.u32 %v789, 16
        %v903 = vshrl.u32 %v817, 16
        %v904 = vpack.i.b16 %v903, %v902
        %v908 = vpack.i.b16 %v865, %v837
        %v910 = vshrl.u32 %v837, 16
        %v911 = vshrl.u32 %v865, 16
        %v912 = vpack.i.b16 %v911, %v910
        %v916 = vpack.i.b16 %v871, %v843
        %v918 = vshrl.u32 %v843, 16
        %v919 = vshrl.u32 %v871, 16
        %v920 = vpack.i.b16 %v919, %v918
        %v924 = vpack.i.b16 %v869, %v841
        %v926 = vshrl.u32 %v841, 16
        %v927 = vshrl.u32 %v869, 16
        %v928 = vpack.i.b16 %v927, %v926
        %v932 = vpack.i.b16 %v873, %v845
        %v934 = vshrl.u32 %v845, 16
        %v935 = vshrl.u32 %v873, 16
        %v936 = vpack.i.b16 %v935, %v934
        %v938 = vrot.slane %v892, 4
        %v939 = vsel %vm550, %v938, %v876
        %v941 = vunpack.c.l.s4 1983009808
        %v942 = vunpack.c.0.s8 %v941
        %v943 = vperm.slane %v939, %v942
        %v944 = vrot.slane %v900, 4
        %v945 = vsel %vm550, %v944, %v884
        %v947 = vunpack.c.l.s4 1983009808
        %v948 = vunpack.c.0.s8 %v947
        %v949 = vperm.slane %v945, %v948
        %v950 = vrot.slane %v949, 4
        %v951 = vsel %vm550, %v950, %v943
        %v952 = vrot.slane %v943, 4
        %v953 = vsel %vm550, %v949, %v952
        %v955 = vunpack.c.l.s4 1934713408
        %v956 = vunpack.c.0.s8 %v955
        %v957 = vperm.slane %v951, %v956
        %v959 = vunpack.c.l.s4 1934713408
        %v960 = vunpack.c.0.s8 %v959
        %v961 = vperm.slane %v953, %v960
        %v962 = vrot.slane %v957, 4
        %v963 = vsel %vm550, 0, %v962
        %v964 = vrot.slane %v961, 4
        %v965 = vsel %vm550, 0, %v964
        %v966 = vrot.slane %v896, 4
        %v967 = vsel %vm550, %v966, %v880
        %v969 = vunpack.c.l.s4 1983009808
        %v970 = vunpack.c.0.s8 %v969
        %v971 = vperm.slane %v967, %v970
        %v972 = vrot.slane %v904, 4
        %v973 = vsel %vm550, %v972, %v888
        %v975 = vunpack.c.l.s4 1983009808
        %v976 = vunpack.c.0.s8 %v975
        %v977 = vperm.slane %v973, %v976
        %v978 = vrot.slane %v977, 4
        %v979 = vsel %vm550, %v978, %v971
        %v980 = vrot.slane %v971, 4
        %v981 = vsel %vm550, %v977, %v980
        %v983 = vunpack.c.l.s4 1934713408
        %v984 = vunpack.c.0.s8 %v983
        %v985 = vperm.slane %v979, %v984
        %v987 = vunpack.c.l.s4 1934713408
        %v988 = vunpack.c.0.s8 %v987
        %v989 = vperm.slane %v981, %v988
        %v990 = vrot.slane %v985, 4
        %v991 = vsel %vm550, 0, %v990
        %v992 = vrot.slane %v989, 4
        %v993 = vsel %vm550, 0, %v992
        %v994 = vrot.slane %v924, 4
        %v995 = vsel %vm550, %v994, %v908
        %v997 = vunpack.c.l.s4 1983009808
        %v998 = vunpack.c.0.s8 %v997
        %v999 = vperm.slane %v995, %v998
        %v1000 = vrot.slane %v932, 4
        %v1001 = vsel %vm550, %v1000, %v916
        %v1003 = vunpack.c.l.s4 1983009808
        %v1004 = vunpack.c.0.s8 %v1003
        %v1005 = vperm.slane %v1001, %v1004
        %v1006 = vrot.slane %v1005, 4
        %v1007 = vsel %vm550, %v1006, %v999
        %v1008 = vrot.slane %v999, 4
        %v1009 = vsel %vm550, %v1005, %v1008
        %v1011 = vunpack.c.l.s4 1934713408
        %v1012 = vunpack.c.0.s8 %v1011
        %v1013 = vperm.slane %v1007, %v1012
        %v1015 = vunpack.c.l.s4 1934713408
        %v1016 = vunpack.c.0.s8 %v1015
        %v1017 = vperm.slane %v1009, %v1016
        %v1018 = vrot.slane %v1013, 4
        %v1019 = vsel %vm550, 0, %v1018
        %v1020 = vrot.slane %v1017, 4
        %v1021 = vsel %vm550, 0, %v1020
        %v1022 = vrot.slane %v928, 4
        %v1023 = vsel %vm550, %v1022, %v912
        %v1025 = vunpack.c.l.s4 1983009808
        %v1026 = vunpack.c.0.s8 %v1025
        %v1027 = vperm.slane %v1023, %v1026
        %v1028 = vrot.slane %v936, 4
        %v1029 = vsel %vm550, %v1028, %v920
        %v1031 = vunpack.c.l.s4 1983009808
        %v1032 = vunpack.c.0.s8 %v1031
        %v1033 = vperm.slane %v1029, %v1032
        %v1034 = vrot.slane %v1033, 4
        %v1035 = vsel %vm550, %v1034, %v1027
        %v1036 = vrot.slane %v1027, 4
        %v1037 = vsel %vm550, %v1033, %v1036
        %v1039 = vunpack.c.l.s4 1934713408
        %v1040 = vunpack.c.0.s8 %v1039
        %v1041 = vperm.slane %v1035, %v1040
        %v1043 = vunpack.c.l.s4 1934713408
        %v1044 = vunpack.c.0.s8 %v1043
        %v1045 = vperm.slane %v1037, %v1044
        %v1046 = vrot.slane %v1041, 4
        %v1047 = vsel %vm550, 0, %v1046
        %v1048 = vrot.slane %v1045, 4
        %v1049 = vsel %vm550, 0, %v1048
        %v1052 = vpack.i.b16 %v985, %v957
        %v1053 = vshrl.u32 %v957, 16
        %v1054 = vshrl.u32 %v985, 16
        %v1055 = vpack.i.b16 %v1054, %v1053
        %v1058 = vpack.i.b16 %v991, %v963
        %v1059 = vshrl.u32 %v963, 16
        %v1060 = vshrl.u32 %v991, 16
        %v1061 = vpack.i.b16 %v1060, %v1059
        %v1064 = vpack.i.b16 %v989, %v961
        %v1065 = vshrl.u32 %v961, 16
        %v1066 = vshrl.u32 %v989, 16
        %v1067 = vpack.i.b16 %v1066, %v1065
        %v1070 = vpack.i.b16 %v993, %v965
        %v1071 = vshrl.u32 %v965, 16
        %v1072 = vshrl.u32 %v993, 16
        %v1073 = vpack.i.b16 %v1072, %v1071
        %v1076 = vpack.i.b16 %v1041, %v1013
        %v1077 = vshrl.u32 %v1013, 16
        %v1078 = vshrl.u32 %v1041, 16
        %v1079 = vpack.i.b16 %v1078, %v1077
        %v1082 = vpack.i.b16 %v1047, %v1019
        %v1083 = vshrl.u32 %v1019, 16
        %v1084 = vshrl.u32 %v1047, 16
        %v1085 = vpack.i.b16 %v1084, %v1083
        %v1088 = vpack.i.b16 %v1045, %v1017
        %v1089 = vshrl.u32 %v1017, 16
        %v1090 = vshrl.u32 %v1045, 16
        %v1091 = vpack.i.b16 %v1090, %v1089
        %v1094 = vpack.i.b16 %v1049, %v1021
        %v1095 = vshrl.u32 %v1021, 16
        %v1096 = vshrl.u32 %v1049, 16
        %v1097 = vpack.i.b16 %v1096, %v1095
        %v1098 = vrot.slane %v525, 4
        %v1099 = vrot.slane %v526, 4
        %v1102 = vrot.slane %v721, 4
        %v1103 = vrot.slane %v723, 4
        %v1106 = vrot.slane %v727, 4
        %v1107 = vrot.slane %v729, 4
        %v1110 = vrot.slane %v733, 4
        %v1111 = vrot.slane %v735, 4
        %v1114 = vrot.slane %v739, 4
        %v1115 = vrot.slane %v741, 4
        %v1118 = vrot.slane %v745, 4
        %v1119 = vrot.slane %v747, 4
        %v1122 = vrot.slane %v751, 4
        %v1123 = vrot.slane %v753, 4
        %v1126 = vrot.slane %v757, 4
        %v1127 = vrot.slane %v759, 4
        %v1130 = vrot.slane %v1114, 4
        %v1131 = vsel %vm550, %v1130, %v1098
        %v1133 = vunpack.c.l.s4 1983009808
        %v1134 = vunpack.c.0.s8 %v1133
        %v1135 = vperm.slane %v1131, %v1134
        %v1136 = vrot.slane %v1122, 4
        %v1137 = vsel %vm550, %v1136, %v1106
        %v1139 = vunpack.c.l.s4 1983009808
        %v1140 = vunpack.c.0.s8 %v1139
        %v1141 = vperm.slane %v1137, %v1140
        %v1142 = vrot.slane %v1141, 4
        %v1143 = vsel %vm550, %v1142, %v1135
        %v1144 = vrot.slane %v1135, 4
        %v1145 = vsel %vm550, %v1141, %v1144
        %v1147 = vunpack.c.l.s4 1934713408
        %v1148 = vunpack.c.0.s8 %v1147
        %v1149 = vperm.slane %v1143, %v1148
        %v1151 = vunpack.c.l.s4 1934713408
        %v1152 = vunpack.c.0.s8 %v1151
        %v1153 = vperm.slane %v1145, %v1152
        %v1154 = vrot.slane %v1149, 4
        %v1155 = vsel %vm550, 0, %v1154
        %v1156 = vrot.slane %v1153, 4
        %v1157 = vsel %vm550, 0, %v1156
        %v1158 = vrot.slane %v1118, 4
        %v1159 = vsel %vm550, %v1158, %v1102
        %v1161 = vunpack.c.l.s4 1983009808
        %v1162 = vunpack.c.0.s8 %v1161
        %v1163 = vperm.slane %v1159, %v1162
        %v1164 = vrot.slane %v1126, 4
        %v1165 = vsel %vm550, %v1164, %v1110
        %v1167 = vunpack.c.l.s4 1983009808
        %v1168 = vunpack.c.0.s8 %v1167
        %v1169 = vperm.slane %v1165, %v1168
        %v1170 = vrot.slane %v1169, 4
        %v1171 = vsel %vm550, %v1170, %v1163
        %v1172 = vrot.slane %v1163, 4
        %v1173 = vsel %vm550, %v1169, %v1172
        %v1175 = vunpack.c.l.s4 1934713408
        %v1176 = vunpack.c.0.s8 %v1175
        %v1177 = vperm.slane %v1171, %v1176
        %v1179 = vunpack.c.l.s4 1934713408
        %v1180 = vunpack.c.0.s8 %v1179
        %v1181 = vperm.slane %v1173, %v1180
        %v1182 = vrot.slane %v1177, 4
        %v1183 = vsel %vm550, 0, %v1182
        %v1184 = vrot.slane %v1181, 4
        %v1185 = vsel %vm550, 0, %v1184
        %v1186 = vrot.slane %v1115, 4
        %v1187 = vsel %vm550, %v1186, %v1099
        %v1189 = vunpack.c.l.s4 1983009808
        %v1190 = vunpack.c.0.s8 %v1189
        %v1191 = vperm.slane %v1187, %v1190
        %v1192 = vrot.slane %v1123, 4
        %v1193 = vsel %vm550, %v1192, %v1107
        %v1195 = vunpack.c.l.s4 1983009808
        %v1196 = vunpack.c.0.s8 %v1195
        %v1197 = vperm.slane %v1193, %v1196
        %v1198 = vrot.slane %v1197, 4
        %v1199 = vsel %vm550, %v1198, %v1191
        %v1200 = vrot.slane %v1191, 4
        %v1201 = vsel %vm550, %v1197, %v1200
        %v1203 = vunpack.c.l.s4 1934713408
        %v1204 = vunpack.c.0.s8 %v1203
        %v1205 = vperm.slane %v1199, %v1204
        %v1207 = vunpack.c.l.s4 1934713408
        %v1208 = vunpack.c.0.s8 %v1207
        %v1209 = vperm.slane %v1201, %v1208
        %v1210 = vrot.slane %v1205, 4
        %v1211 = vsel %vm550, 0, %v1210
        %v1212 = vrot.slane %v1209, 4
        %v1213 = vsel %vm550, 0, %v1212
        %v1214 = vrot.slane %v1119, 4
        %v1215 = vsel %vm550, %v1214, %v1103
        %v1217 = vunpack.c.l.s4 1983009808
        %v1218 = vunpack.c.0.s8 %v1217
        %v1219 = vperm.slane %v1215, %v1218
        %v1220 = vrot.slane %v1127, 4
        %v1221 = vsel %vm550, %v1220, %v1111
        %v1223 = vunpack.c.l.s4 1983009808
        %v1224 = vunpack.c.0.s8 %v1223
        %v1225 = vperm.slane %v1221, %v1224
        %v1226 = vrot.slane %v1225, 4
        %v1227 = vsel %vm550, %v1226, %v1219
        %v1228 = vrot.slane %v1219, 4
        %v1229 = vsel %vm550, %v1225, %v1228
        %v1231 = vunpack.c.l.s4 1934713408
        %v1232 = vunpack.c.0.s8 %v1231
        %v1233 = vperm.slane %v1227, %v1232
        %v1235 = vunpack.c.l.s4 1934713408
        %v1236 = vunpack.c.0.s8 %v1235
        %v1237 = vperm.slane %v1229, %v1236
        %v1238 = vrot.slane %v1233, 4
        %v1239 = vsel %vm550, 0, %v1238
        %v1240 = vrot.slane %v1237, 4
        %v1241 = vsel %vm550, 0, %v1240
        %v1244 = vpack.i.b16 %v1177, %v1149
        %v1246 = vshrl.u32 %v1149, 16
        %v1247 = vshrl.u32 %v1177, 16
        %v1248 = vpack.i.b16 %v1247, %v1246
        %v1252 = vpack.i.b16 %v1183, %v1155
        %v1254 = vshrl.u32 %v1155, 16
        %v1255 = vshrl.u32 %v1183, 16
        %v1256 = vpack.i.b16 %v1255, %v1254
        %v1260 = vpack.i.b16 %v1181, %v1153
        %v1262 = vshrl.u32 %v1153, 16
        %v1263 = vshrl.u32 %v1181, 16
        %v1264 = vpack.i.b16 %v1263, %v1262
        %v1268 = vpack.i.b16 %v1185, %v1157
        %v1270 = vshrl.u32 %v1157, 16
        %v1271 = vshrl.u32 %v1185, 16
        %v1272 = vpack.i.b16 %v1271, %v1270
        %v1276 = vpack.i.b16 %v1233, %v1205
        %v1278 = vshrl.u32 %v1205, 16
        %v1279 = vshrl.u32 %v1233, 16
        %v1280 = vpack.i.b16 %v1279, %v1278
        %v1284 = vpack.i.b16 %v1239, %v1211
        %v1286 = vshrl.u32 %v1211, 16
        %v1287 = vshrl.u32 %v1239, 16
        %v1288 = vpack.i.b16 %v1287, %v1286
        %v1292 = vpack.i.b16 %v1237, %v1209
        %v1294 = vshrl.u32 %v1209, 16
        %v1295 = vshrl.u32 %v1237, 16
        %v1296 = vpack.i.b16 %v1295, %v1294
        %v1300 = vpack.i.b16 %v1241, %v1213
        %v1302 = vshrl.u32 %v1213, 16
        %v1303 = vshrl.u32 %v1241, 16
        %v1304 = vpack.i.b16 %v1303, %v1302
        %v1306 = vrot.slane %v1260, 4
        %v1307 = vsel %vm550, %v1306, %v1244
        %v1309 = vunpack.c.l.s4 1983009808
        %v1310 = vunpack.c.0.s8 %v1309
        %v1311 = vperm.slane %v1307, %v1310
        %v1312 = vrot.slane %v1268, 4
        %v1313 = vsel %vm550, %v1312, %v1252
        %v1315 = vunpack.c.l.s4 1983009808
        %v1316 = vunpack.c.0.s8 %v1315
        %v1317 = vperm.slane %v1313, %v1316
        %v1318 = vrot.slane %v1317, 4
        %v1319 = vsel %vm550, %v1318, %v1311
        %v1320 = vrot.slane %v1311, 4
        %v1321 = vsel %vm550, %v1317, %v1320
        %v1323 = vunpack.c.l.s4 1934713408
        %v1324 = vunpack.c.0.s8 %v1323
        %v1325 = vperm.slane %v1319, %v1324
        %v1327 = vunpack.c.l.s4 1934713408
        %v1328 = vunpack.c.0.s8 %v1327
        %v1329 = vperm.slane %v1321, %v1328
        %v1330 = vrot.slane %v1325, 4
        %v1331 = vsel %vm550, 0, %v1330
        %v1332 = vrot.slane %v1329, 4
        %v1333 = vsel %vm550, 0, %v1332
        %v1334 = vrot.slane %v1264, 4
        %v1335 = vsel %vm550, %v1334, %v1248
        %v1337 = vunpack.c.l.s4 1983009808
        %v1338 = vunpack.c.0.s8 %v1337
        %v1339 = vperm.slane %v1335, %v1338
        %v1340 = vrot.slane %v1272, 4
        %v1341 = vsel %vm550, %v1340, %v1256
        %v1343 = vunpack.c.l.s4 1983009808
        %v1344 = vunpack.c.0.s8 %v1343
        %v1345 = vperm.slane %v1341, %v1344
        %v1346 = vrot.slane %v1345, 4
        %v1347 = vsel %vm550, %v1346, %v1339
        %v1348 = vrot.slane %v1339, 4
        %v1349 = vsel %vm550, %v1345, %v1348
        %v1351 = vunpack.c.l.s4 1934713408
        %v1352 = vunpack.c.0.s8 %v1351
        %v1353 = vperm.slane %v1347, %v1352
        %v1355 = vunpack.c.l.s4 1934713408
        %v1356 = vunpack.c.0.s8 %v1355
        %v1357 = vperm.slane %v1349, %v1356
        %v1358 = vrot.slane %v1353, 4
        %v1359 = vsel %vm550, 0, %v1358
        %v1360 = vrot.slane %v1357, 4
        %v1361 = vsel %vm550, 0, %v1360
        %v1362 = vrot.slane %v1292, 4
        %v1363 = vsel %vm550, %v1362, %v1276
        %v1365 = vunpack.c.l.s4 1983009808
        %v1366 = vunpack.c.0.s8 %v1365
        %v1367 = vperm.slane %v1363, %v1366
        %v1368 = vrot.slane %v1300, 4
        %v1369 = vsel %vm550, %v1368, %v1284
        %v1371 = vunpack.c.l.s4 1983009808
        %v1372 = vunpack.c.0.s8 %v1371
        %v1373 = vperm.slane %v1369, %v1372
        %v1374 = vrot.slane %v1373, 4
        %v1375 = vsel %vm550, %v1374, %v1367
        %v1376 = vrot.slane %v1367, 4
        %v1377 = vsel %vm550, %v1373, %v1376
        %v1379 = vunpack.c.l.s4 1934713408
        %v1380 = vunpack.c.0.s8 %v1379
        %v1381 = vperm.slane %v1375, %v1380
        %v1383 = vunpack.c.l.s4 1934713408
        %v1384 = vunpack.c.0.s8 %v1383
        %v1385 = vperm.slane %v1377, %v1384
        %v1386 = vrot.slane %v1381, 4
        %v1387 = vsel %vm550, 0, %v1386
        %v1388 = vrot.slane %v1385, 4
        %v1389 = vsel %vm550, 0, %v1388
        %v1390 = vrot.slane %v1296, 4
        %v1391 = vsel %vm550, %v1390, %v1280
        %v1393 = vunpack.c.l.s4 1983009808
        %v1394 = vunpack.c.0.s8 %v1393
        %v1395 = vperm.slane %v1391, %v1394
        %v1396 = vrot.slane %v1304, 4
        %v1397 = vsel %vm550, %v1396, %v1288
        %v1399 = vunpack.c.l.s4 1983009808
        %v1400 = vunpack.c.0.s8 %v1399
        %v1401 = vperm.slane %v1397, %v1400
        %v1402 = vrot.slane %v1401, 4
        %v1403 = vsel %vm550, %v1402, %v1395
        %v1404 = vrot.slane %v1395, 4
        %v1405 = vsel %vm550, %v1401, %v1404
        %v1407 = vunpack.c.l.s4 1934713408
        %v1408 = vunpack.c.0.s8 %v1407
        %v1409 = vperm.slane %v1403, %v1408
        %v1411 = vunpack.c.l.s4 1934713408
        %v1412 = vunpack.c.0.s8 %v1411
        %v1413 = vperm.slane %v1405, %v1412
        %v1414 = vrot.slane %v1409, 4
        %v1415 = vsel %vm550, 0, %v1414
        %v1416 = vrot.slane %v1413, 4
        %v1417 = vsel %vm550, 0, %v1416
        %v1420 = vpack.i.b16 %v1353, %v1325
        %v1421 = vshrl.u32 %v1325, 16
        %v1422 = vshrl.u32 %v1353, 16
        %v1423 = vpack.i.b16 %v1422, %v1421
        %v1426 = vpack.i.b16 %v1359, %v1331
        %v1427 = vshrl.u32 %v1331, 16
        %v1428 = vshrl.u32 %v1359, 16
        %v1429 = vpack.i.b16 %v1428, %v1427
        %v1432 = vpack.i.b16 %v1357, %v1329
        %v1433 = vshrl.u32 %v1329, 16
        %v1434 = vshrl.u32 %v1357, 16
        %v1435 = vpack.i.b16 %v1434, %v1433
        %v1438 = vpack.i.b16 %v1361, %v1333
        %v1439 = vshrl.u32 %v1333, 16
        %v1440 = vshrl.u32 %v1361, 16
        %v1441 = vpack.i.b16 %v1440, %v1439
        %v1444 = vpack.i.b16 %v1409, %v1381
        %v1445 = vshrl.u32 %v1381, 16
        %v1446 = vshrl.u32 %v1409, 16
        %v1447 = vpack.i.b16 %v1446, %v1445
        %v1450 = vpack.i.b16 %v1415, %v1387
        %v1451 = vshrl.u32 %v1387, 16
        %v1452 = vshrl.u32 %v1415, 16
        %v1453 = vpack.i.b16 %v1452, %v1451
        %v1456 = vpack.i.b16 %v1413, %v1385
        %v1457 = vshrl.u32 %v1385, 16
        %v1458 = vshrl.u32 %v1413, 16
        %v1459 = vpack.i.b16 %v1458, %v1457
        %v1462 = vpack.i.b16 %v1417, %v1389
        %v1463 = vshrl.u32 %v1389, 16
        %v1464 = vshrl.u32 %v1417, 16
        %v1465 = vpack.i.b16 %v1464, %v1463
        %v1466 = vunpack.c.l.b16 %v1052
        %v1467 = vunpack.c.l.b16 %v1076
        %v1468 = vpack.c.b16 %v1467, %v1466
        %vm1469 = vcmask 130048
        %v1471 = vsel %vm1469, %v696, 0
        %v1474 = vsel %vm1469, %v1468, 0
        %1476 = vmatpush.bf16.xpose.msra.mxu0 0
        %1477 = vmatpush.bf16.xpose.msra.mxu0 0
        %1478 = vmatpush.bf16.xpose.msra.mxu0 0
        %1479 = vmatpush.bf16.xpose.msra.mxu0 0
        %1480 = vmatpush.bf16.xpose.msra.mxu0 0
        %1481 = vmatpush.bf16.xpose.msra.mxu0 0
        %1482 = vmatpush.bf16.xpose.msra.mxu0 0
        %1483 = vmatpush.bf16.xpose.msra.mxu0 %v1474
        %1484 = vmatmul.bf16.gmra.mxu0 %v1471
        %v1485 = vpop.f32.mrf.mxu0
        %v1486 = vadd.f32 0.0, %v1485
        %v1487 = vpop.f32.mrf.mxu0
        %1488 = vdwg.mxu0
        %v1489 = vunpack.c.l.b16 %v1055
        %v1490 = vunpack.c.l.b16 %v1079
        %v1491 = vpack.c.b16 %v1490, %v1489
        %v1493 = vsel %vm1469, %v699, 0
        %v1496 = vsel %vm1469, %v1491, 0
        %1498 = vmatpush.bf16.xpose.msra.mxu0 0
        %1499 = vmatpush.bf16.xpose.msra.mxu0 0
        %1500 = vmatpush.bf16.xpose.msra.mxu0 0
        %1501 = vmatpush.bf16.xpose.msra.mxu0 0
        %1502 = vmatpush.bf16.xpose.msra.mxu0 0
        %1503 = vmatpush.bf16.xpose.msra.mxu0 0
        %1504 = vmatpush.bf16.xpose.msra.mxu0 0
        %1505 = vmatpush.bf16.xpose.msra.mxu0 %v1496
        %1506 = vmatmul.bf16.gmra.mxu0 %v1493
        %v1507 = vpop.f32.mrf.mxu0
        %v1508 = vadd.f32 0.0, %v1507
        %v1509 = vpop.f32.mrf.mxu0
        %1510 = vdwg.mxu0
        %v1511 = vunpack.c.l.b16 %v1058
        %v1512 = vunpack.c.l.b16 %v1082
        %v1513 = vpack.c.b16 %v1512, %v1511
        %v1515 = vsel %vm1469, %v702, 0
        %v1518 = vsel %vm1469, %v1513, 0
        %1520 = vmatpush.bf16.xpose.msra.mxu0 0
        %1521 = vmatpush.bf16.xpose.msra.mxu0 0
        %1522 = vmatpush.bf16.xpose.msra.mxu0 0
        %1523 = vmatpush.bf16.xpose.msra.mxu0 0
        %1524 = vmatpush.bf16.xpose.msra.mxu0 0
        %1525 = vmatpush.bf16.xpose.msra.mxu0 0
        %1526 = vmatpush.bf16.xpose.msra.mxu0 0
        %1527 = vmatpush.bf16.xpose.msra.mxu0 %v1518
        %1528 = vmatmul.bf16.gmra.mxu0 %v1515
        %v1529 = vpop.f32.mrf.mxu0
        %v1530 = vadd.f32 0.0, %v1529
        %v1531 = vpop.f32.mrf.mxu0
        %1532 = vdwg.mxu0
        %v1533 = vunpack.c.l.b16 %v1061
        %v1534 = vunpack.c.l.b16 %v1085
        %v1535 = vpack.c.b16 %v1534, %v1533
        %v1537 = vsel %vm1469, %v705, 0
        %v1540 = vsel %vm1469, %v1535, 0
        %1542 = vmatpush.bf16.xpose.msra.mxu0 0
        %1543 = vmatpush.bf16.xpose.msra.mxu0 0
        %1544 = vmatpush.bf16.xpose.msra.mxu0 0
        %1545 = vmatpush.bf16.xpose.msra.mxu0 0
        %1546 = vmatpush.bf16.xpose.msra.mxu0 0
        %1547 = vmatpush.bf16.xpose.msra.mxu0 0
        %1548 = vmatpush.bf16.xpose.msra.mxu0 0
        %1549 = vmatpush.bf16.xpose.msra.mxu0 %v1540
        %1550 = vmatmul.bf16.gmra.mxu0 %v1537
        %v1551 = vpop.f32.mrf.mxu0
        %v1552 = vadd.f32 0.0, %v1551
        %v1553 = vpop.f32.mrf.mxu0
        %1554 = vdwg.mxu0
        %v1555 = vunpack.c.l.b16 %v1064
        %v1556 = vunpack.c.l.b16 %v1088
        %v1557 = vpack.c.b16 %v1556, %v1555
        %v1559 = vsel %vm1469, %v708, 0
        %v1562 = vsel %vm1469, %v1557, 0
        %1564 = vmatpush.bf16.xpose.msra.mxu0 0
        %1565 = vmatpush.bf16.xpose.msra.mxu0 0
        %1566 = vmatpush.bf16.xpose.msra.mxu0 0
        %1567 = vmatpush.bf16.xpose.msra.mxu0 0
        %1568 = vmatpush.bf16.xpose.msra.mxu0 0
        %1569 = vmatpush.bf16.xpose.msra.mxu0 0
        %1570 = vmatpush.bf16.xpose.msra.mxu0 0
        %1571 = vmatpush.bf16.xpose.msra.mxu0 %v1562
        %1572 = vmatmul.bf16.gmra.mxu0 %v1559
        %v1573 = vpop.f32.mrf.mxu0
        %v1574 = vadd.f32 0.0, %v1573
        %v1575 = vpop.f32.mrf.mxu0
        %1576 = vdwg.mxu0
        %v1577 = vunpack.c.l.b16 %v1067
        %v1578 = vunpack.c.l.b16 %v1091
        %v1579 = vpack.c.b16 %v1578, %v1577
        %v1581 = vsel %vm1469, %v711, 0
        %v1584 = vsel %vm1469, %v1579, 0
        %1586 = vmatpush.bf16.xpose.msra.mxu0 0
        %1587 = vmatpush.bf16.xpose.msra.mxu0 0
        %1588 = vmatpush.bf16.xpose.msra.mxu0 0
        %1589 = vmatpush.bf16.xpose.msra.mxu0 0
        %1590 = vmatpush.bf16.xpose.msra.mxu0 0
        %1591 = vmatpush.bf16.xpose.msra.mxu0 0
        %1592 = vmatpush.bf16.xpose.msra.mxu0 0
        %1593 = vmatpush.bf16.xpose.msra.mxu0 %v1584
        %1594 = vmatmul.bf16.gmra.mxu0 %v1581
        %v1595 = vpop.f32.mrf.mxu0
        %v1596 = vadd.f32 0.0, %v1595
        %v1597 = vpop.f32.mrf.mxu0
        %1598 = vdwg.mxu0
        %v1599 = vunpack.c.l.b16 %v1070
        %v1600 = vunpack.c.l.b16 %v1094
        %v1601 = vpack.c.b16 %v1600, %v1599
        %v1603 = vsel %vm1469, %v714, 0
        %v1606 = vsel %vm1469, %v1601, 0
        %1608 = vmatpush.bf16.xpose.msra.mxu0 0
        %1609 = vmatpush.bf16.xpose.msra.mxu0 0
        %1610 = vmatpush.bf16.xpose.msra.mxu0 0
        %1611 = vmatpush.bf16.xpose.msra.mxu0 0
        %1612 = vmatpush.bf16.xpose.msra.mxu0 0
        %1613 = vmatpush.bf16.xpose.msra.mxu0 0
        %1614 = vmatpush.bf16.xpose.msra.mxu0 0
        %1615 = vmatpush.bf16.xpose.msra.mxu0 %v1606
        %1616 = vmatmul.bf16.gmra.mxu0 %v1603
        %v1617 = vpop.f32.mrf.mxu0
        %v1618 = vadd.f32 0.0, %v1617
        %v1619 = vpop.f32.mrf.mxu0
        %1620 = vdwg.mxu0
        %v1621 = vunpack.c.l.b16 %v1073
        %v1622 = vunpack.c.l.b16 %v1097
        %v1623 = vpack.c.b16 %v1622, %v1621
        %v1625 = vsel %vm1469, %v717, 0
        %v1628 = vsel %vm1469, %v1623, 0
        %1630 = vmatpush.bf16.xpose.msra.mxu0 0
        %1631 = vmatpush.bf16.xpose.msra.mxu0 0
        %1632 = vmatpush.bf16.xpose.msra.mxu0 0
        %1633 = vmatpush.bf16.xpose.msra.mxu0 0
        %1634 = vmatpush.bf16.xpose.msra.mxu0 0
        %1635 = vmatpush.bf16.xpose.msra.mxu0 0
        %1636 = vmatpush.bf16.xpose.msra.mxu0 0
        %1637 = vmatpush.bf16.xpose.msra.mxu0 %v1628
        %1638 = vmatmul.bf16.gmra.mxu0 %v1625
        %v1639 = vpop.f32.mrf.mxu0
        %v1640 = vadd.f32 0.0, %v1639
        %v1641 = vpop.f32.mrf.mxu0
        %1642 = vdwg.mxu0
        %v1643 = vsel %vm1469, %v1486, -inf
        %1644 = vmax.xlane.f32.xlu0 %v1643
        %v1645 = vpop.xlane.xlu0 %1644
        %v1646 = vsel %vm1469, %v1508, -inf
        %1647 = vmax.xlane.f32.xlu0 %v1646
        %v1648 = vpop.xlane.xlu0 %1647
        %v1649 = vsel %vm1469, %v1530, -inf
        %1650 = vmax.xlane.f32.xlu0 %v1649
        %v1651 = vpop.xlane.xlu0 %1650
        %v1652 = vsel %vm1469, %v1552, -inf
        %1653 = vmax.xlane.f32.xlu0 %v1652
        %v1654 = vpop.xlane.xlu0 %1653
        %v1655 = vsel %vm1469, %v1574, -inf
        %1656 = vmax.xlane.f32.xlu0 %v1655
        %v1657 = vpop.xlane.xlu0 %1656
        %v1658 = vsel %vm1469, %v1596, -inf
        %1659 = vmax.xlane.f32.xlu0 %v1658
        %v1660 = vpop.xlane.xlu0 %1659
        %v1661 = vsel %vm1469, %v1618, -inf
        %1662 = vmax.xlane.f32.xlu0 %v1661
        %v1663 = vpop.xlane.xlu0 %1662
        %v1664 = vsel %vm1469, %v1640, -inf
        %1665 = vmax.xlane.f32.xlu0 %v1664
        %v1666 = vpop.xlane.xlu0 %1665
        %v1667 = vsub.f32 %v1486, %v1645
        %v1668 = vsub.f32 %v1508, %v1648
        %v1669 = vsub.f32 %v1530, %v1651
        %v1670 = vsub.f32 %v1552, %v1654
        %v1671 = vsub.f32 %v1574, %v1657
        %v1672 = vsub.f32 %v1596, %v1660
        %v1673 = vsub.f32 %v1618, %v1663
        %v1674 = vsub.f32 %v1640, %v1666
        %v1675 = vmul.f32 %v1667, 1.442695
        %v1676 = vpow.pop %v1675
        %v1677 = vmul.f32 %v1668, 1.442695
        %v1678 = vpow.pop %v1677
        %v1679 = vmul.f32 %v1669, 1.442695
        %v1680 = vpow.pop %v1679
        %v1681 = vmul.f32 %v1670, 1.442695
        %v1682 = vpow.pop %v1681
        %v1683 = vmul.f32 %v1671, 1.442695
        %v1684 = vpow.pop %v1683
        %v1685 = vmul.f32 %v1672, 1.442695
        %v1686 = vpow.pop %v1685
        %v1687 = vmul.f32 %v1673, 1.442695
        %v1688 = vpow.pop %v1687
        %v1689 = vmul.f32 %v1674, 1.442695
        %v1690 = vpow.pop %v1689
        %v1691 = vsel %vm1469, %v1676, 0.0
        %1692 = vadd.xlane.f32.xlu0 %v1691
        %v1693 = vpop.xlane.xlu0 %1692
        %v1694 = vsel %vm1469, %v1678, 0.0
        %1695 = vadd.xlane.f32.xlu0 %v1694
        %v1696 = vpop.xlane.xlu0 %1695
        %v1697 = vsel %vm1469, %v1680, 0.0
        %1698 = vadd.xlane.f32.xlu0 %v1697
        %v1699 = vpop.xlane.xlu0 %1698
        %v1700 = vsel %vm1469, %v1682, 0.0
        %1701 = vadd.xlane.f32.xlu0 %v1700
        %v1702 = vpop.xlane.xlu0 %1701
        %v1703 = vsel %vm1469, %v1684, 0.0
        %1704 = vadd.xlane.f32.xlu0 %v1703
        %v1705 = vpop.xlane.xlu0 %1704
        %v1706 = vsel %vm1469, %v1686, 0.0
        %1707 = vadd.xlane.f32.xlu0 %v1706
        %v1708 = vpop.xlane.xlu0 %1707
        %v1709 = vsel %vm1469, %v1688, 0.0
        %1710 = vadd.xlane.f32.xlu0 %v1709
        %v1711 = vpop.xlane.xlu0 %1710
        %v1712 = vsel %vm1469, %v1690, 0.0
        %1713 = vadd.xlane.f32.xlu0 %v1712
        %v1714 = vpop.xlane.xlu0 %1713
        %v1715 = vrcp.pop %v1693
        %v1716 = vrcp.pop %v1696
        %v1717 = vrcp.pop %v1699
        %v1718 = vrcp.pop %v1702
        %v1719 = vrcp.pop %v1705
        %v1720 = vrcp.pop %v1708
        %v1721 = vrcp.pop %v1711
        %v1722 = vrcp.pop %v1714
        %v1723 = vpack.c.bf16 %v1676, %v1676
        %v1724 = vpack.c.bf16 %v1678, %v1678
        %v1725 = vpack.c.bf16 %v1680, %v1680
        %v1726 = vpack.c.bf16 %v1682, %v1682
        %v1727 = vpack.c.bf16 %v1684, %v1684
        %v1728 = vpack.c.bf16 %v1686, %v1686
        %v1729 = vpack.c.bf16 %v1688, %v1688
        %v1730 = vpack.c.bf16 %v1690, %v1690
        %v1731 = vunpack.c.l.b16 %v1420
        %v1732 = vunpack.c.l.b16 %v1444
        %v1733 = vpack.c.b16 %v1732, %v1731
        %v1736 = vsel %vm1469, %v1723, 0
        %1738 = vmatpush.bf16.msra.mxu0 0
        %1739 = vmatpush.bf16.msra.mxu0 0
        %1740 = vmatpush.bf16.msra.mxu0 0
        %1741 = vmatpush.bf16.msra.mxu0 0
        %1742 = vmatpush.bf16.msra.mxu0 0
        %1743 = vmatpush.bf16.msra.mxu0 0
        %1744 = vmatpush.bf16.msra.mxu0 0
        %1745 = vmatpush.bf16.msra.mxu0 %v1733
        %1746 = vmatmul.bf16.gmra.mxu0 %v1736
        %v1747 = vpop.f32.mrf.mxu0
        %v1748 = vadd.f32 0.0, %v1747
        %v1749 = vpop.f32.mrf.mxu0
        %1750 = vdwg.mxu0
        %v1751 = vunpack.c.l.b16 %v1423
        %v1752 = vunpack.c.l.b16 %v1447
        %v1753 = vpack.c.b16 %v1752, %v1751
        %v1756 = vsel %vm1469, %v1724, 0
        %1758 = vmatpush.bf16.msra.mxu0 0
        %1759 = vmatpush.bf16.msra.mxu0 0
        %1760 = vmatpush.bf16.msra.mxu0 0
        %1761 = vmatpush.bf16.msra.mxu0 0
        %1762 = vmatpush.bf16.msra.mxu0 0
        %1763 = vmatpush.bf16.msra.mxu0 0
        %1764 = vmatpush.bf16.msra.mxu0 0
        %1765 = vmatpush.bf16.msra.mxu0 %v1753
        %1766 = vmatmul.bf16.gmra.mxu0 %v1756
        %v1767 = vpop.f32.mrf.mxu0
        %v1768 = vadd.f32 0.0, %v1767
        %v1769 = vpop.f32.mrf.mxu0
        %1770 = vdwg.mxu0
        %v1771 = vunpack.c.l.b16 %v1426
        %v1772 = vunpack.c.l.b16 %v1450
        %v1773 = vpack.c.b16 %v1772, %v1771
        %v1776 = vsel %vm1469, %v1725, 0
        %1778 = vmatpush.bf16.msra.mxu0 0
        %1779 = vmatpush.bf16.msra.mxu0 0
        %1780 = vmatpush.bf16.msra.mxu0 0
        %1781 = vmatpush.bf16.msra.mxu0 0
        %1782 = vmatpush.bf16.msra.mxu0 0
        %1783 = vmatpush.bf16.msra.mxu0 0
        %1784 = vmatpush.bf16.msra.mxu0 0
        %1785 = vmatpush.bf16.msra.mxu0 %v1773
        %1786 = vmatmul.bf16.gmra.mxu0 %v1776
        %v1787 = vpop.f32.mrf.mxu0
        %v1788 = vadd.f32 0.0, %v1787
        %v1789 = vpop.f32.mrf.mxu0
        %1790 = vdwg.mxu0
        %v1791 = vunpack.c.l.b16 %v1429
        %v1792 = vunpack.c.l.b16 %v1453
        %v1793 = vpack.c.b16 %v1792, %v1791
        %v1796 = vsel %vm1469, %v1726, 0
        %1798 = vmatpush.bf16.msra.mxu0 0
        %1799 = vmatpush.bf16.msra.mxu0 0
        %1800 = vmatpush.bf16.msra.mxu0 0
        %1801 = vmatpush.bf16.msra.mxu0 0
        %1802 = vmatpush.bf16.msra.mxu0 0
        %1803 = vmatpush.bf16.msra.mxu0 0
        %1804 = vmatpush.bf16.msra.mxu0 0
        %1805 = vmatpush.bf16.msra.mxu0 %v1793
        %1806 = vmatmul.bf16.gmra.mxu0 %v1796
        %v1807 = vpop.f32.mrf.mxu0
        %v1808 = vadd.f32 0.0, %v1807
        %v1809 = vpop.f32.mrf.mxu0
        %1810 = vdwg.mxu0
        %v1811 = vunpack.c.l.b16 %v1432
        %v1812 = vunpack.c.l.b16 %v1456
        %v1813 = vpack.c.b16 %v1812, %v1811
        %v1816 = vsel %vm1469, %v1727, 0
        %1818 = vmatpush.bf16.msra.mxu0 0
        %1819 = vmatpush.bf16.msra.mxu0 0
        %1820 = vmatpush.bf16.msra.mxu0 0
        %1821 = vmatpush.bf16.msra.mxu0 0
        %1822 = vmatpush.bf16.msra.mxu0 0
        %1823 = vmatpush.bf16.msra.mxu0 0
        %1824 = vmatpush.bf16.msra.mxu0 0
        %1825 = vmatpush.bf16.msra.mxu0 %v1813
        %1826 = vmatmul.bf16.gmra.mxu0 %v1816
        %v1827 = vpop.f32.mrf.mxu0
        %v1828 = vadd.f32 0.0, %v1827
        %v1829 = vpop.f32.mrf.mxu0
        %1830 = vdwg.mxu0
        %v1831 = vunpack.c.l.b16 %v1435
        %v1832 = vunpack.c.l.b16 %v1459
        %v1833 = vpack.c.b16 %v1832, %v1831
        %v1836 = vsel %vm1469, %v1728, 0
        %1838 = vmatpush.bf16.msra.mxu0 0
        %1839 = vmatpush.bf16.msra.mxu0 0
        %1840 = vmatpush.bf16.msra.mxu0 0
        %1841 = vmatpush.bf16.msra.mxu0 0
        %1842 = vmatpush.bf16.msra.mxu0 0
        %1843 = vmatpush.bf16.msra.mxu0 0
        %1844 = vmatpush.bf16.msra.mxu0 0
        %1845 = vmatpush.bf16.msra.mxu0 %v1833
        %1846 = vmatmul.bf16.gmra.mxu0 %v1836
        %v1847 = vpop.f32.mrf.mxu0
        %v1848 = vadd.f32 0.0, %v1847
        %v1849 = vpop.f32.mrf.mxu0
        %1850 = vdwg.mxu0
        %v1851 = vunpack.c.l.b16 %v1438
        %v1852 = vunpack.c.l.b16 %v1462
        %v1853 = vpack.c.b16 %v1852, %v1851
        %v1856 = vsel %vm1469, %v1729, 0
        %1858 = vmatpush.bf16.msra.mxu0 0
        %1859 = vmatpush.bf16.msra.mxu0 0
        %1860 = vmatpush.bf16.msra.mxu0 0
        %1861 = vmatpush.bf16.msra.mxu0 0
        %1862 = vmatpush.bf16.msra.mxu0 0
        %1863 = vmatpush.bf16.msra.mxu0 0
        %1864 = vmatpush.bf16.msra.mxu0 0
        %1865 = vmatpush.bf16.msra.mxu0 %v1853
        %1866 = vmatmul.bf16.gmra.mxu0 %v1856
        %v1867 = vpop.f32.mrf.mxu0
        %v1868 = vadd.f32 0.0, %v1867
        %v1869 = vpop.f32.mrf.mxu0
        %1870 = vdwg.mxu0
        %v1871 = vunpack.c.l.b16 %v1441
        %v1872 = vunpack.c.l.b16 %v1465
        %v1873 = vpack.c.b16 %v1872, %v1871
        %v1876 = vsel %vm1469, %v1730, 0
        %1878 = vmatpush.bf16.msra.mxu0 0
        %1879 = vmatpush.bf16.msra.mxu0 0
        %1880 = vmatpush.bf16.msra.mxu0 0
        %1881 = vmatpush.bf16.msra.mxu0 0
        %1882 = vmatpush.bf16.msra.mxu0 0
        %1883 = vmatpush.bf16.msra.mxu0 0
        %1884 = vmatpush.bf16.msra.mxu0 0
        %1885 = vmatpush.bf16.msra.mxu0 %v1873
        %1886 = vmatmul.bf16.gmra.mxu0 %v1876
        %v1887 = vpop.f32.mrf.mxu0
        %v1888 = vadd.f32 0.0, %v1887
        %v1889 = vpop.f32.mrf.mxu0
        %1890 = vdwg.mxu0
        %v1891 = vmul.f32 %v1748, %v1715
        %v1892 = vmul.f32 %v1768, %v1716
        %v1893 = vmul.f32 %v1788, %v1717
        %v1894 = vmul.f32 %v1808, %v1718
        %v1895 = vmul.f32 %v1828, %v1719
        %v1896 = vmul.f32 %v1848, %v1720
        %v1897 = vmul.f32 %v1868, %v1721
        %v1898 = vmul.f32 %v1888, %v1722
        %v1899 = vpack.c.bf16 %v1891, %v1891
        %v1900 = vpack.c.bf16 %v1892, %v1892
        %v1901 = vpack.c.bf16 %v1893, %v1893
        %v1902 = vpack.c.bf16 %v1894, %v1894
        %v1903 = vpack.c.bf16 %v1895, %v1895
        %v1904 = vpack.c.bf16 %v1896, %v1896
        %v1905 = vpack.c.bf16 %v1897, %v1897
        %v1906 = vpack.c.bf16 %v1898, %v1898
        %v1907 = vrot.slane %v1903, 4
        %v1908 = vsel %vm550, %v1907, %v1899
        %v1910 = vunpack.c.l.s4 1983009808
        %v1911 = vunpack.c.0.s8 %v1910
        %v1912 = vperm.slane %v1908, %v1911
        %v1913 = vrot.slane %v1905, 4
        %v1914 = vsel %vm550, %v1913, %v1901
        %v1916 = vunpack.c.l.s4 1983009808
        %v1917 = vunpack.c.0.s8 %v1916
        %v1918 = vperm.slane %v1914, %v1917
        %v1919 = vrot.slane %v1918, 4
        %v1920 = vsel %vm550, %v1919, %v1912
        %v1921 = vrot.slane %v1912, 4
        %v1922 = vsel %vm550, %v1918, %v1921
        %v1924 = vunpack.c.l.s4 1934713408
        %v1925 = vunpack.c.0.s8 %v1924
        %v1926 = vperm.slane %v1920, %v1925
        %v1928 = vunpack.c.l.s4 1934713408
        %v1929 = vunpack.c.0.s8 %v1928
        %v1930 = vperm.slane %v1922, %v1929
        %v1931 = vrot.slane %v1926, 4
        %v1932 = vsel %vm550, 0, %v1931
        %v1933 = vrot.slane %v1930, 4
        %v1934 = vsel %vm550, 0, %v1933
        %v1935 = vrot.slane %v1904, 4
        %v1936 = vsel %vm550, %v1935, %v1900
        %v1938 = vunpack.c.l.s4 1983009808
        %v1939 = vunpack.c.0.s8 %v1938
        %v1940 = vperm.slane %v1936, %v1939
        %v1941 = vrot.slane %v1906, 4
        %v1942 = vsel %vm550, %v1941, %v1902
        %v1944 = vunpack.c.l.s4 1983009808
        %v1945 = vunpack.c.0.s8 %v1944
        %v1946 = vperm.slane %v1942, %v1945
        %v1947 = vrot.slane %v1946, 4
        %v1948 = vsel %vm550, %v1947, %v1940
        %v1949 = vrot.slane %v1940, 4
        %v1950 = vsel %vm550, %v1946, %v1949
        %v1952 = vunpack.c.l.s4 1934713408
        %v1953 = vunpack.c.0.s8 %v1952
        %v1954 = vperm.slane %v1948, %v1953
        %v1956 = vunpack.c.l.s4 1934713408
        %v1957 = vunpack.c.0.s8 %v1956
        %v1958 = vperm.slane %v1950, %v1957
        %v1959 = vrot.slane %v1954, 4
        %v1960 = vsel %vm550, 0, %v1959
        %v1961 = vrot.slane %v1958, 4
        %v1962 = vsel %vm550, 0, %v1961
        %v1965 = vpack.i.b16 %v1954, %v1926
        %v1967 = vshrl.u32 %v1926, 16
        %v1968 = vshrl.u32 %v1954, 16
        %v1969 = vpack.i.b16 %v1968, %v1967
        %v1973 = vpack.i.b16 %v1960, %v1932
        %v1975 = vshrl.u32 %v1932, 16
        %v1976 = vshrl.u32 %v1960, 16
        %v1977 = vpack.i.b16 %v1976, %v1975
        %v1981 = vpack.i.b16 %v1958, %v1930
        %v1983 = vshrl.u32 %v1930, 16
        %v1984 = vshrl.u32 %v1958, 16
        %v1985 = vpack.i.b16 %v1984, %v1983
        %v1989 = vpack.i.b16 %v1962, %v1934
        %v1991 = vshrl.u32 %v1934, 16
        %v1992 = vshrl.u32 %v1962, 16
        %v1993 = vpack.i.b16 %v1992, %v1991
        %v1995 = vrot.slane %v1981, 4
        %v1996 = vsel %vm550, %v1995, %v1965
        %v1998 = vunpack.c.l.s4 1983009808
        %v1999 = vunpack.c.0.s8 %v1998
        %v2000 = vperm.slane %v1996, %v1999
        %v2001 = vrot.slane %v1989, 4
        %v2002 = vsel %vm550, %v2001, %v1973
        %v2004 = vunpack.c.l.s4 1983009808
        %v2005 = vunpack.c.0.s8 %v2004
        %v2006 = vperm.slane %v2002, %v2005
        %v2007 = vrot.slane %v2006, 4
        %v2008 = vsel %vm550, %v2007, %v2000
        %v2009 = vrot.slane %v2000, 4
        %v2010 = vsel %vm550, %v2006, %v2009
        %v2012 = vunpack.c.l.s4 1934713408
        %v2013 = vunpack.c.0.s8 %v2012
        %v2014 = vperm.slane %v2008, %v2013
        %v2016 = vunpack.c.l.s4 1934713408
        %v2017 = vunpack.c.0.s8 %v2016
        %v2018 = vperm.slane %v2010, %v2017
        %v2019 = vrot.slane %v2014, 4
        %v2020 = vsel %vm550, 0, %v2019
        %v2021 = vrot.slane %v2018, 4
        %v2022 = vsel %vm550, 0, %v2021
        %v2023 = vrot.slane %v1985, 4
        %v2024 = vsel %vm550, %v2023, %v1969
        %v2026 = vunpack.c.l.s4 1983009808
        %v2027 = vunpack.c.0.s8 %v2026
        %v2028 = vperm.slane %v2024, %v2027
        %v2029 = vrot.slane %v1993, 4
        %v2030 = vsel %vm550, %v2029, %v1977
        %v2032 = vunpack.c.l.s4 1983009808
        %v2033 = vunpack.c.0.s8 %v2032
        %v2034 = vperm.slane %v2030, %v2033
        %v2035 = vrot.slane %v2034, 4
        %v2036 = vsel %vm550, %v2035, %v2028
        %v2037 = vrot.slane %v2028, 4
        %v2038 = vsel %vm550, %v2034, %v2037
        %v2040 = vunpack.c.l.s4 1934713408
        %v2041 = vunpack.c.0.s8 %v2040
        %v2042 = vperm.slane %v2036, %v2041
        %v2044 = vunpack.c.l.s4 1934713408
        %v2045 = vunpack.c.0.s8 %v2044
        %v2046 = vperm.slane %v2038, %v2045
        %v2047 = vrot.slane %v2042, 4
        %v2048 = vsel %vm550, 0, %v2047
        %v2049 = vrot.slane %v2046, 4
        %v2050 = vsel %vm550, 0, %v2049
        %v2053 = vpack.i.b16 %v2042, %v2014
        %v2054 = vshrl.u32 %v2014, 16
        %v2055 = vshrl.u32 %v2042, 16
        %v2056 = vpack.i.b16 %v2055, %v2054
        %v2059 = vpack.i.b16 %v2048, %v2020
        %v2060 = vshrl.u32 %v2020, 16
        %v2061 = vshrl.u32 %v2048, 16
        %v2062 = vpack.i.b16 %v2061, %v2060
        %v2065 = vpack.i.b16 %v2046, %v2018
        %v2066 = vshrl.u32 %v2018, 16
        %v2067 = vshrl.u32 %v2046, 16
        %v2068 = vpack.i.b16 %v2067, %v2066
        %v2071 = vpack.i.b16 %v2050, %v2022
        %v2072 = vshrl.u32 %v2022, 16
        %v2073 = vshrl.u32 %v2050, 16
        %v2074 = vpack.i.b16 %v2073, %v2072
        %v2075 = vunpack.c.l.b16 %v2056
        %v2076 = vpack.c.b16 %v2075, %v2075
        %2077 = vrot.lane.b32.xlu0 %v2076, 16
        %v2078 = vpop.permute.xlu0 %2077
        %v2079 = vunpack.c.l.b16 %v2059
        %v2080 = vpack.c.b16 %v2079, %v2079
        %2081 = vrot.lane.b32.xlu0 %v2080, 32
        %v2082 = vpop.permute.xlu0 %2081
        %v2083 = vunpack.c.l.b16 %v2062
        %v2084 = vpack.c.b16 %v2083, %v2083
        %2085 = vrot.lane.b32.xlu0 %v2084, 48
        %v2086 = vpop.permute.xlu0 %2085
        %v2087 = vunpack.c.l.b16 %v2065
        %v2088 = vpack.c.b16 %v2087, %v2087
        %2089 = vrot.lane.b32.xlu0 %v2088, 64
        %v2090 = vpop.permute.xlu0 %2089
        %v2091 = vunpack.c.l.b16 %v2068
        %v2092 = vpack.c.b16 %v2091, %v2091
        %2093 = vrot.lane.b32.xlu0 %v2092, 80
        %v2094 = vpop.permute.xlu0 %2093
        %v2095 = vunpack.c.l.b16 %v2071
        %v2096 = vpack.c.b16 %v2095, %v2095
        %2097 = vrot.lane.b32.xlu0 %v2096, 96
        %v2098 = vpop.permute.xlu0 %2097
        %v2099 = vunpack.c.l.b16 %v2074
        %v2100 = vpack.c.b16 %v2099, %v2099
        %2101 = vrot.lane.b32.xlu0 %v2100, 112
        %v2102 = vpop.permute.xlu0 %2101
        %v2105 = vsel %vm1469, %v2053, %v2078
        %vm2106 = vcmask 261120
        %v2108 = vsel %vm2106, %v2105, %v2082
        %vm2109 = vcmask 392192
        %v2111 = vsel %vm2109, %v2108, %v2086
        %v2113 = vsel %vm507, %v2111, %v2090
        %vm2114 = vcmask 654336
        %v2116 = vsel %vm2114, %v2113, %v2094
        %vm2117 = vcmask 785408
        %v2119 = vsel %vm2117, %v2116, %v2098
        %vm2120 = vcmask 916480
        %v2122 = vsel %vm2120, %v2119, %v2102
        %v2124 = vld [vmem:[#allocation11] sm:$0xf]
        %v2125 = vld [vmem:[#allocation11 + $0x4] sm:$0xf]
        %v2126 = vld [vmem:[#allocation11 + $0x8] sm:$0xf]
        %v2127 = vld [vmem:[#allocation11 + $0xc] sm:$0xf]
        %v2128 = vld [vmem:[#allocation11 + $0x10] sm:$0xf]
        %v2129 = vld [vmem:[#allocation11 + $0x14] sm:$0xf]
        %v2130 = vld [vmem:[#allocation11 + $0x18] sm:$0xf]
        %v2131 = vld [vmem:[#allocation11 + $0x1c] sm:$0xf]
        %v2132 = vld [vmem:[#allocation11 + $0x20] sm:$0xf]
        %v2133 = vld [vmem:[#allocation11 + $0x24] sm:$0xf]
        %v2134 = vld [vmem:[#allocation11 + $0x28] sm:$0xf]
        %v2135 = vld [vmem:[#allocation11 + $0x2c] sm:$0xf]
        %v2136 = vld [vmem:[#allocation11 + $0x30] sm:$0xf]
        %v2137 = vld [vmem:[#allocation11 + $0x34] sm:$0xf]
        %v2138 = vld [vmem:[#allocation11 + $0x38] sm:$0xf]
        %v2139 = vld [vmem:[#allocation11 + $0x3c] sm:$0xf]
        %v2140 = vld [vmem:[%s5] sm:$0x1]
        %v2142 = vperm.slane %v2140, 0
        %v2160 = vunpack.c.l.b16 %v2124
        %v2161 = vunpack.c.l.b16 %v2125
        %v2162 = vunpack.c.l.b16 %v2126
        %v2163 = vunpack.c.l.b16 %v2127
        %v2164 = vunpack.c.l.b16 %v2128
        %v2165 = vunpack.c.l.b16 %v2129
        %v2166 = vunpack.c.l.b16 %v2130
        %v2167 = vunpack.c.l.b16 %v2131
        %v2168 = vunpack.c.l.b16 %v2132
        %v2169 = vunpack.c.l.b16 %v2133
        %v2170 = vunpack.c.l.b16 %v2134
        %v2171 = vunpack.c.l.b16 %v2135
        %v2172 = vunpack.c.l.b16 %v2136
        %v2173 = vunpack.c.l.b16 %v2137
        %v2174 = vunpack.c.l.b16 %v2138
        %v2175 = vunpack.c.l.b16 %v2139
        %v2176 = vpack.c.b16 %v2161, %v2160
        %v2177 = vpack.c.b16 %v2163, %v2162
        %v2178 = vpack.c.b16 %v2165, %v2164
        %v2179 = vpack.c.b16 %v2167, %v2166
        %v2180 = vpack.c.b16 %v2169, %v2168
        %v2181 = vpack.c.b16 %v2171, %v2170
        %v2182 = vpack.c.b16 %v2173, %v2172
        %v2183 = vpack.c.b16 %v2175, %v2174
        %2192 = vmatpush.bf16.msra.mxu0 %v2183
        %2193 = vmatpush.bf16.msra.mxu0 %v2182
        %2194 = vmatpush.bf16.msra.mxu0 %v2181
        %2195 = vmatpush.bf16.msra.mxu0 %v2180
        %2196 = vmatpush.bf16.msra.mxu0 %v2179
        %2197 = vmatpush.bf16.msra.mxu0 %v2178
        %2198 = vmatpush.bf16.msra.mxu0 %v2177
        %2199 = vmatpush.bf16.msra.mxu0 %v2176
        %2200 = vmatmul.bf16.gmra.mxu0 %v2122
        %v2201 = vpop.f32.mrf.mxu0
        %v2202 = vadd.f32 %v2142, %v2201
        %v2203 = vpop.f32.mrf.mxu0
        %2204 = vdwg.mxu0
        %2205 = vst [vmem:[%s377] sm:$0xff] %v2202
        %s2206 = sand.u32 %s187, 1
        %s2207 = scalar_lea.sflag [#allocation5], %s2206
        %s2208 = sand.u32 %s187, 1
        %s2209 = smul.addr %s2208, 8
        %s2210 = scalar_lea.vmem [#allocation12], %s2209
        // Predicated region
        $region69: #{tpu_custom_call.1} parent=43 // pred_check
          %p2211 = pneg %p197
        $region70: #{tpu_custom_call.1} parent=43 // pred_check_branch
          %2213 = sbr.rel (%p2211) target = $region72
        $region71: #{tpu_custom_call.1} parent=43 // pred_region
          %2215 = vsyncadd %s2207, 0
          %s2216 = smul.addr %s31, 2
          %s2217 = sadd.s32 %s32, %s2216
          %s2218 = smul.addr %s2217, 8
          %s2219 = scalar_lea.hbm %s6, %s2218
          %s2221 = sshll.u32 %s2210, 4
          %s2222 = int_to_ptr.vmem [resolvable:$true] %s2221
          %s2223 = sshll.u32 %s2219, 4
          %s2224 = int_to_ptr.hbm [resolvable:$true] %s2223
          %2226 = dma.vmem_to_hbm [thread:$0]  %s2222, 128, %s2224, %s2207
        $region72: #{tpu_custom_call.1} parent=43 // pred_fallthru
          _
      $region44: #{tpu_custom_call.1} parent=5 // pred_fallthru
        _
      %p2227 = scmp.le.s32.totalorder 2, %s22
      // Predicated region
      $region73: #{tpu_custom_call.1} parent=5 // pred_check
        %p2228 = pneg %p2227
      $region74: #{tpu_custom_call.1} parent=5 // pred_check_branch
        %2230 = sbr.rel (%p2228) target = $region76
      $region75: #{tpu_custom_call.1} parent=5 // pred_region
        %s2231 = ssub.s32 %s22, 2
        // Predicated region
        $region77: #{tpu_custom_call.1} parent=75 // pred_check
          %p2232 = pneg %p203
        $region78: #{tpu_custom_call.1} parent=75 // pred_check_branch
          %2234 = sbr.rel (%p2232) target = $region80
        $region79: #{tpu_custom_call.1} parent=75 // pred_region
          %s2235 = sand.u32 %s188, 1
          %s2236 = scalar_lea.sflag [#allocation5], %s2235
          %s2237 = sand.u32 %s188, 1
          %s2238 = smul.addr %s2237, 8
          %s2239 = scalar_lea.vmem [#allocation12], %s2238
          %2241 = dma.done %s2236, 128
        $region80: #{tpu_custom_call.1} parent=75 // pred_fallthru
          _
      $region76: #{tpu_custom_call.1} parent=5 // pred_fallthru
        _
    $region6: #{tpu_custom_call.1} parent=1 // loop_footer
      %s26 = sadd.s32 1, %s22
    $region7: #{tpu_custom_call.1} parent=1 // loop_footer_branch
      %21 = sbr.rel target = $region3
    $region8: #{tpu_custom_call.1} parent=1 // loop_exit
      _
    %2242 = vsyncpa [#allocation4], 1
    %s2243 = scalar_lea.sflag [#allocation4], 1
    %2244 = vsyncpa %s2243, 1
    %2245 = vsyncpa [#allocation7], 1
    %s2246 = scalar_lea.sflag [#allocation7], 1
    %2247 = vsyncpa %s2246, 1
    %2248 = vsyncpa [#allocation10], 1
    %2249 = vsyncpa [#allocation5], 1
    %s2250 = scalar_lea.sflag [#allocation5], 1
    %2251 = vsyncpa %s2250, 1

</llo_original>
